<compile_context>
chip_gen: v7x
topology: tpu7x:2x2x1
jax: 0.10.0
libtpu: 0.0.40
codegen_flags: <defaults>
</compile_context>

<pallas_src>
import math

import jax
import jax.numpy as jnp
from jax.experimental import pallas as pl
from jax.experimental.pallas import tpu as pltpu

# ---------------------------------------------------------------------------
# Model configuration (static).
# ---------------------------------------------------------------------------
IN_DIM = 2             # coordinate dimensionality
HIDDEN = 32            # hidden_size
OUT_DIM = 4            # out_size
N_LAYERS = 3           # n_layers -> n_filters = N_LAYERS + 1
N_FILTERS = N_LAYERS + 1
FH = N_FILTERS * HIDDEN        # fused filter width = 128 (one full lane group)
OUTPUT_ACT = False     # module default

TILE_N_MAX = 4096      # sweep 2048-8192; above ~8192 set vmem_limit_bytes (v7x: 64 MiB VMEM)
TILE_N_MIN = 128

# Reduced-range sine validity: |arg| <= IN_DIM * sqrt(6/IN_DIM) * |coords| + pi.
# With |coords| <= 1 this is ~6.6; the single-step Cody-Waite reduction below is accurate
# far beyond that, but tie the assumption to the config so a change cannot silently break it.
_COORD_BOUND = 1.0
_MAX_SIN_ARG = IN_DIM * math.sqrt(6.0 / IN_DIM) * _COORD_BOUND + math.pi
assert _MAX_SIN_ARG < 1e3, "fast_sin range-reduction assumption violated by config"


def _detect_chip():
    """Pick the elementwise-chain dtype and TC count from the local TPU generation."""
    try:
        kind = jax.devices()[0].device_kind.lower()
    except Exception:  # pragma: no cover - conservative fallback
        kind = ""
    is_v7 = ("v7" in kind) or ("7x" in kind)
    use_bf16 = ("v6" in kind) or is_v7       # v5e has no bf16 VPU/EUP -> keep f32 there
    n_cores = 2 if is_v7 else 1              # v7x: 2 TensorCores/chip (megacore sharding)
    return (jnp.bfloat16 if use_bf16 else jnp.float32), n_cores


CHAIN_DTYPE, N_TC_CORES = _detect_chip()


# ---------------------------------------------------------------------------
# Reduced-range sine: x - pi*round(x/pi) (Cody-Waite split) + odd degree-9 polynomial.
# Reduction runs in f32 (few ops); the polynomial (bulk of the VPU work) runs in
# `poly_dtype` (bf16 on v6e/v7x).  Max abs error ~4e-6 with the f32 polynomial.
# ---------------------------------------------------------------------------
_INV_PI = 0.3183098861837907
_PI_HI = 3.140625                 # 8-significant-bit head, exact in f32
_PI_LO = 9.67653589793e-04        # pi - _PI_HI
_S3, _S5, _S7, _S9 = -1.0 / 6.0, 1.0 / 120.0, -1.0 / 5040.0, 1.0 / 362880.0


def fast_sin(x, poly_dtype=jnp.float32):
    x = x.astype(jnp.float32)
    k = jnp.floor(x * _INV_PI + 0.5)              # nearest multiple of pi
    r = (x - k * _PI_HI) - k * _PI_LO             # r in [-pi/2, pi/2]
    parity = k - 2.0 * jnp.floor(k * 0.5)         # 0.0 / 1.0  -> (-1)^k
    r = r * (1.0 - 2.0 * parity)                  # fold sign (polynomial is odd)
    r = r.astype(poly_dtype)
    r2 = r * r
    q = r2 * _S9 + _S7
    q = q * r2 + _S5
    q = q * r2 + _S3
    return r + r * r2 * q


# ---------------------------------------------------------------------------
# Pallas kernel: full MFN chain for one lane-dense tile of coordinate columns.
#   coords_ref : (IN_DIM+1, TN) f32   -- channels-first, last row is ones (bias fused)
#   wfb_ref    : (FH, IN_DIM+1)       -- stacked filter weights | bias column
#   wlb_ref    : (N_LAYERS, HIDDEN, HIDDEN+1)
#   wob_ref    : (OUT_DIM, HIDDEN+1)
#   out_ref    : (OUT_DIM, TN) f32    -- channels-first, full-lane stores
# ---------------------------------------------------------------------------
def _make_mfn_kernel(chain_dtype):
    cd = chain_dtype

    def mfn_kernel(coords_ref, wfb_ref, wlb_ref, wob_ref, out_ref):
        x = coords_ref[...]                                          # (IN_DIM+1, TN) f32

        # Fused filter bank: one K=IN_DIM+1 MXU push (bias rides the ones row),
        # one reduced-range sin over a lane-dense 128-row slab.
        arg = jnp.dot(wfb_ref[...], x, preferred_element_type=jnp.float32)  # (FH, TN)
        filt = fast_sin(arg, cd)                                             # (FH, TN) cd

        # out = filters[0](coords)
        z = filt[0:HIDDEN, :]

        # out = filters[i](coords) * linear[i-1](out)
        for i in range(1, N_FILTERS):
            wlb_i = wlb_ref[i - 1]                                    # (H, H+1) f32
            lin = (jnp.dot(wlb_i[:, :HIDDEN].astype(cd), z,
                           preferred_element_type=jnp.float32)
                   + wlb_i[:, HIDDEN:])                               # (H, TN) f32
            z = filt[i * HIDDEN:(i + 1) * HIDDEN, :] * lin.astype(cd)

        # out = output_linear(out)
        wob = wob_ref[...]                                            # (O, H+1) f32
        out = (jnp.dot(wob[:, :HIDDEN].astype(cd), z,
                       preferred_element_type=jnp.float32)
               + wob[:, HIDDEN:])                                     # (O, TN) f32
        if OUTPUT_ACT:
            out = fast_sin(out, jnp.float32)
        out_ref[...] = out.astype(out_ref.dtype)

    return mfn_kernel


_MFN_KERNEL = _make_mfn_kernel(CHAIN_DTYPE)


# ---------------------------------------------------------------------------
# Parameter packing: fold biases into a trailing column so the kernel sees only three
# grid-invariant weight operands.  Weights stay in the PyTorch (out_features, in_features)
# layout, which is exactly what the channels-first kernel wants.
# ---------------------------------------------------------------------------
def pack_params(wf, bf, wl, bl, wo, bo):
    f32 = jnp.float32
    wfb = jnp.concatenate([wf.reshape(FH, IN_DIM).astype(f32),
                           bf.reshape(FH, 1).astype(f32)], axis=1)          # (FH, IN_DIM+1)
    wlb = jnp.concatenate([wl.astype(f32), bl[..., None].astype(f32)], axis=2)  # (NL,H,H+1)
    wob = jnp.concatenate([wo.astype(f32), bo[:, None].astype(f32)], axis=1)    # (O, H+1)
    return wfb, wlb, wob


def _choose_tile_n(n):
    # >= ~4 grid steps per TensorCore when N allows (pipeline overlap, v7x load balance),
    # capped at TILE_N_MAX to amortize per-grid-step overhead at large N.
    target_steps = max(2, 4 * N_TC_CORES)
    tile = -(-n // target_steps)          # cdiv
    tile = -(-tile // 128) * 128          # lane multiple (unmasked full-lane stores)
    return max(TILE_N_MIN, min(TILE_N_MAX, tile))


# ---------------------------------------------------------------------------
# Channels-first entry point (no input/output transposes): (IN_DIM, N) -> (OUT_DIM, N).
# ---------------------------------------------------------------------------
@jax.jit
def mfn_forward_cf(coords_cf, wf, bf, wl, bl, wo, bo):
    n = coords_cf.shape[1]
    tile_n = _choose_tile_n(n)
    n_pad = (-n) % tile_n
    n_padded = n + n_pad

    # Append ones row (folds filter bias into the MXU) and pad N to a tile multiple;
    # padded columns are sliced off after the kernel.
    x_aug = jnp.concatenate(
        [coords_cf.astype(jnp.float32), jnp.ones((1, n), jnp.float32)], axis=0)
    if n_pad:
        x_aug = jnp.pad(x_aug, ((0, 0), (0, n_pad)))

    wfb, wlb, wob = pack_params(wf, bf, wl, bl, wo, bo)
    grid = (n_padded // tile_n,)

    out_cf = pl.pallas_call(
        _MFN_KERNEL,
        out_shape=jax.ShapeDtypeStruct((OUT_DIM, n_padded), jnp.float32),
        grid_spec=pltpu.PrefetchScalarGridSpec(
            num_scalar_prefetch=0,
            grid=grid,
            in_specs=[
                # coords (+ones row): tiled along the lane (row-count) dimension
                pl.BlockSpec((IN_DIM + 1, tile_n), lambda i: (0, i)),
                # packed filter weights|bias: grid-invariant
                pl.BlockSpec((FH, IN_DIM + 1), lambda i: (0, 0)),
                # packed hidden linear weights|bias
                pl.BlockSpec((N_LAYERS, HIDDEN, HIDDEN + 1), lambda i: (0, 0, 0)),
                # packed output linear weights|bias
                pl.BlockSpec((OUT_DIM, HIDDEN + 1), lambda i: (0, 0)),
            ],
            out_specs=pl.BlockSpec((OUT_DIM, tile_n), lambda i: (0, i)),
        ),
        # Per-step VMEM at TILE_N_MAX=4096 is ~3 MiB, well under the 32 MiB default scoped
        # limit on every generation (incl. v7x, 64 MiB physical).  Set vmem_limit_bytes
        # explicitly only when sweeping tile_n above ~8192.
        compiler_params=pltpu.CompilerParams(
            dimension_semantics=("parallel",)),
    )(x_aug, wfb, wlb, wob)

    return out_cf[:, :n]


# ---------------------------------------------------------------------------
# Module-facing wrapper (original semantics): coords (N, IN_DIM) -> (N, OUT_DIM).
# Perf-sensitive callers should use mfn_forward_cf to skip both transposes.
# ---------------------------------------------------------------------------
@jax.jit
def mfn_forward(coords, wf, bf, wl, bl, wo, bo):
    return mfn_forward_cf(coords.T, wf, bf, wl, bl, wo, bo).T


# ---------------------------------------------------------------------------
# Deterministic parameter init (mfn_weights_init: U(-sqrt(6/fan_in), +)),
# weights in PyTorch (out_features, in_features) layout.
# ---------------------------------------------------------------------------
def init_params(key):
    ks = jax.random.split(key, 6)

    def uniform_fanin(k, shape, fan_in):
        bound = math.sqrt(6.0 / fan_in)
        return jax.random.uniform(k, shape, jnp.float32, -bound, bound)

    wf = uniform_fanin(ks[0], (N_FILTERS, HIDDEN, IN_DIM), IN_DIM)
    bf = jax.random.uniform(ks[1], (N_FILTERS, HIDDEN), jnp.float32, -math.pi, math.pi)
    wl = uniform_fanin(ks[2], (N_LAYERS, HIDDEN, HIDDEN), HIDDEN)
    bl = uniform_fanin(ks[3], (N_LAYERS, HIDDEN), HIDDEN)
    wo = uniform_fanin(ks[4], (OUT_DIM, HIDDEN), HIDDEN)
    bo = uniform_fanin(ks[5], (OUT_DIM,), HIDDEN)
    return wf, bf, wl, bl, wo, bo


# ---------------------------------------------------------------------------
# References.
# ---------------------------------------------------------------------------
def mfn_reference_exact(coords, wf, bf, wl, bl, wo, bo):
    """Pure-JAX f32 reference mirroring the PyTorch forward (jnp.sin, f32 chain)."""
    out = jnp.sin(coords @ wf[0].T + bf[0])
    for i in range(1, N_FILTERS):
        out = jnp.sin(coords @ wf[i].T + bf[i]) * (out @ wl[i - 1].T + bl[i - 1])
    out = out @ wo.T + bo
    if OUTPUT_ACT:
        out = jnp.sin(out)
    return out


def mfn_reference_mirror(coords, wf, bf, wl, bl, wo, bo, chain_dtype):
    """Pure-JAX reference mirroring the kernel's exact numerics (fast_sin + chain dtype)."""
    cd = chain_dtype
    coords = coords.astype(jnp.float32)
    filt = [fast_sin(coords @ wf[i].T + bf[i], cd) for i in range(N_FILTERS)]
    z = filt[0]
    for i in range(1, N_FILTERS):
        lin = (jnp.dot(z, wl[i - 1].T.astype(cd),
                       preferred_element_type=jnp.float32) + bl[i - 1])
        z = filt[i] * lin.astype(cd)
    out = jnp.dot(z, wo.T.astype(cd), preferred_element_type=jnp.float32) + bo
    if OUTPUT_ACT:
        out = fast_sin(out, jnp.float32)
    return out


if __name__ == "__main__":
    key = jax.random.PRNGKey(0)
    k_coords, k_params = jax.random.split(key)

    # Ragged N on purpose: exercises wrapper-side padding and the adaptive tile choice.
    N = 2000
    coords = jax.random.uniform(k_coords, (N, IN_DIM), jnp.float32, -1.0, 1.0)
    wf, bf, wl, bl, wo, bo = init_params(k_params)

    out = mfn_forward(coords, wf, bf, wl, bl, wo, bo)
    out = jax.block_until_ready(out)
    assert out.shape == (N, OUT_DIM)

    # mimic the module's return structure (autograd bookkeeping is torch-only)
    result = {"model_in": {"coords": coords}, "model_out": {"output": out}}

    exact = mfn_reference_exact(coords, wf, bf, wl, bl, wo, bo)
    if CHAIN_DTYPE == jnp.float32:
        # f32 chain (v5e / unknown): only the reduced-range sine (~4e-6) separates us
        # from jnp.sin.
        max_err = float(jnp.max(jnp.abs(out - exact)))
        assert jnp.allclose(out, exact, atol=2e-4, rtol=1e-4), (
            f"mismatch vs f32 reference, max abs err = {max_err}")
    else:
        # bf16 chain (v6e/v7x): compare against a reference that mirrors the kernel's
        # cast points; report drift vs true f32 math informationally.
        mirror = mfn_reference_mirror(coords, wf, bf, wl, bl, wo, bo, CHAIN_DTYPE)
        mirror = mirror.astype(jnp.float32)
        err_m = float(jnp.max(jnp.abs(out - mirror)))
        err_e = float(jnp.max(jnp.abs(out - exact)))
        assert jnp.allclose(out, mirror, atol=5e-2, rtol=2e-2), (
            f"mismatch vs bf16-mirrored reference, max abs err = {err_m} "
            f"(vs f32 exact = {err_e})")

    print("KERNEL_OK")
</pallas_src>

<mosaic_0001>
module attributes {stable_mosaic.version = 11 : i64} {
  func.func @mfn_kernel(%arg0: i32, %arg1: memref<3x512xf32, #tpu.memory_space<vmem>>, %arg2: memref<128x3xf32, #tpu.memory_space<vmem>>, %arg3: memref<3x32x33xf32, #tpu.memory_space<vmem>>, %arg4: memref<4x33xf32, #tpu.memory_space<vmem>>, %arg5: memref<4x512xf32, #tpu.memory_space<vmem>>) attributes {dimension_semantics = [#tpu.dimension_semantics<parallel>], iteration_bounds = array<i64: 4>, scalar_prefetch = 0 : i64, scratch_operands = 0 : i64, tpu.core_type = #tpu.core_type<tc>, window_params = [{transform_indices = @transform_0, window_bounds = array<i64: 3, 512>}, {pipeline_mode = #tpu.pipeline_mode<synchronous>, transform_indices = @transform_1, window_bounds = array<i64: 128, 3>}, {pipeline_mode = #tpu.pipeline_mode<synchronous>, transform_indices = @transform_2, window_bounds = array<i64: 3, 32, 33>}, {pipeline_mode = #tpu.pipeline_mode<synchronous>, transform_indices = @transform_3, window_bounds = array<i64: 4, 33>}, {transform_indices = @transform_4, window_bounds = array<i64: 4, 512>}]} {
    %c0 = arith.constant 0 : index
    %c0_0 = arith.constant 0 : index
    %0 = vector.load %arg1[%c0, %c0_0] : memref<3x512xf32, #tpu.memory_space<vmem>>, vector<3x512xf32>
    %c0_1 = arith.constant 0 : index
    %c0_2 = arith.constant 0 : index
    %1 = vector.load %arg2[%c0_1, %c0_2] : memref<128x3xf32, #tpu.memory_space<vmem>>, vector<128x3xf32>
    %cst = arith.constant dense<0.000000e+00> : vector<128x512xf32>
    %2 = tpu.matmul %1, %0, %cst {dimension_numbers = #tpu.dot_dimension_numbers<[1], [0], [0], [1], [0, 0, 1, 1], [], []>} : vector<128x3xf32>, vector<3x512xf32>, vector<128x512xf32> -> vector<128x512xf32>
    %cst_3 = arith.constant 0.318309873 : f32
    %3 = vector.broadcast %cst_3 : f32 to vector<128x512xf32>
    %4 = arith.mulf %2, %3 : vector<128x512xf32>
    %cst_4 = arith.constant 5.000000e-01 : f32
    %5 = vector.broadcast %cst_4 : f32 to vector<128x512xf32>
    %6 = arith.addf %4, %5 : vector<128x512xf32>
    %7 = math.floor %6 : vector<128x512xf32>
    %cst_5 = arith.constant 3.140625 : f32
    %8 = vector.broadcast %cst_5 : f32 to vector<128x512xf32>
    %9 = arith.mulf %7, %8 : vector<128x512xf32>
    %10 = arith.subf %2, %9 : vector<128x512xf32>
    %cst_6 = arith.constant 9.67653584E-4 : f32
    %11 = vector.broadcast %cst_6 : f32 to vector<128x512xf32>
    %12 = arith.mulf %7, %11 : vector<128x512xf32>
    %13 = arith.subf %10, %12 : vector<128x512xf32>
    %cst_7 = arith.constant 5.000000e-01 : f32
    %14 = vector.broadcast %cst_7 : f32 to vector<128x512xf32>
    %15 = arith.mulf %7, %14 : vector<128x512xf32>
    %16 = math.floor %15 : vector<128x512xf32>
    %cst_8 = arith.constant 2.000000e+00 : f32
    %17 = vector.broadcast %cst_8 : f32 to vector<128x512xf32>
    %18 = arith.mulf %17, %16 : vector<128x512xf32>
    %19 = arith.subf %7, %18 : vector<128x512xf32>
    %cst_9 = arith.constant 2.000000e+00 : f32
    %20 = vector.broadcast %cst_9 : f32 to vector<128x512xf32>
    %21 = arith.mulf %20, %19 : vector<128x512xf32>
    %cst_10 = arith.constant 1.000000e+00 : f32
    %22 = vector.broadcast %cst_10 : f32 to vector<128x512xf32>
    %23 = arith.subf %22, %21 : vector<128x512xf32>
    %24 = arith.mulf %13, %23 : vector<128x512xf32>
    %25 = arith.mulf %24, %24 : vector<128x512xf32>
    %cst_11 = arith.constant 2.75573188E-6 : f32
    %26 = vector.broadcast %cst_11 : f32 to vector<128x512xf32>
    %27 = arith.mulf %25, %26 : vector<128x512xf32>
    %cst_12 = arith.constant -1.98412701E-4 : f32
    %28 = vector.broadcast %cst_12 : f32 to vector<128x512xf32>
    %29 = arith.addf %27, %28 : vector<128x512xf32>
    %30 = arith.mulf %29, %25 : vector<128x512xf32>
    %cst_13 = arith.constant 0.00833333377 : f32
    %31 = vector.broadcast %cst_13 : f32 to vector<128x512xf32>
    %32 = arith.addf %30, %31 : vector<128x512xf32>
    %33 = arith.mulf %32, %25 : vector<128x512xf32>
    %cst_14 = arith.constant -0.166666672 : f32
    %34 = vector.broadcast %cst_14 : f32 to vector<128x512xf32>
    %35 = arith.addf %33, %34 : vector<128x512xf32>
    %36 = arith.mulf %24, %25 : vector<128x512xf32>
    %37 = arith.mulf %36, %35 : vector<128x512xf32>
    %38 = arith.addf %24, %37 : vector<128x512xf32>
    %39 = vector.extract_strided_slice %38 {offsets = [0, 0], sizes = [32, 512], strides = [1, 1]} : vector<128x512xf32> to vector<32x512xf32>
    %c0_15 = arith.constant 0 : index
    %c0_16 = arith.constant 0 : index
    %c0_17 = arith.constant 0 : index
    %40 = vector.load %arg3[%c0_15, %c0_16, %c0_17] : memref<3x32x33xf32, #tpu.memory_space<vmem>>, vector<1x32x33xf32>
    %41 = vector.shape_cast %40 : vector<1x32x33xf32> to vector<32x33xf32>
    %42 = vector.extract_strided_slice %41 {offsets = [0, 0], sizes = [32, 32], strides = [1, 1]} : vector<32x33xf32> to vector<32x32xf32>
    %cst_18 = arith.constant dense<0.000000e+00> : vector<32x512xf32>
    %43 = tpu.matmul %42, %39, %cst_18 {dimension_numbers = #tpu.dot_dimension_numbers<[1], [0], [0], [1], [0, 0, 1, 1], [], []>} : vector<32x32xf32>, vector<32x512xf32>, vector<32x512xf32> -> vector<32x512xf32>
    %44 = vector.extract_strided_slice %41 {offsets = [0, 32], sizes = [32, 1], strides = [1, 1]} : vector<32x33xf32> to vector<32x1xf32>
    %45 = vector.broadcast %44 : vector<32x1xf32> to vector<32x512xf32>
    %46 = arith.addf %43, %45 : vector<32x512xf32>
    %47 = vector.extract_strided_slice %38 {offsets = [32, 0], sizes = [32, 512], strides = [1, 1]} : vector<128x512xf32> to vector<32x512xf32>
    %48 = arith.mulf %47, %46 : vector<32x512xf32>
    %c1 = arith.constant 1 : index
    %c0_19 = arith.constant 0 : index
    %c0_20 = arith.constant 0 : index
    %49 = vector.load %arg3[%c1, %c0_19, %c0_20] : memref<3x32x33xf32, #tpu.memory_space<vmem>>, vector<1x32x33xf32>
    %50 = vector.shape_cast %49 : vector<1x32x33xf32> to vector<32x33xf32>
    %51 = vector.extract_strided_slice %50 {offsets = [0, 0], sizes = [32, 32], strides = [1, 1]} : vector<32x33xf32> to vector<32x32xf32>
    %cst_21 = arith.constant dense<0.000000e+00> : vector<32x512xf32>
    %52 = tpu.matmul %51, %48, %cst_21 {dimension_numbers = #tpu.dot_dimension_numbers<[1], [0], [0], [1], [0, 0, 1, 1], [], []>} : vector<32x32xf32>, vector<32x512xf32>, vector<32x512xf32> -> vector<32x512xf32>
    %53 = vector.extract_strided_slice %50 {offsets = [0, 32], sizes = [32, 1], strides = [1, 1]} : vector<32x33xf32> to vector<32x1xf32>
    %54 = vector.broadcast %53 : vector<32x1xf32> to vector<32x512xf32>
    %55 = arith.addf %52, %54 : vector<32x512xf32>
    %56 = vector.extract_strided_slice %38 {offsets = [64, 0], sizes = [32, 512], strides = [1, 1]} : vector<128x512xf32> to vector<32x512xf32>
    %57 = arith.mulf %56, %55 : vector<32x512xf32>
    %c2 = arith.constant 2 : index
    %c0_22 = arith.constant 0 : index
    %c0_23 = arith.constant 0 : index
    %58 = vector.load %arg3[%c2, %c0_22, %c0_23] : memref<3x32x33xf32, #tpu.memory_space<vmem>>, vector<1x32x33xf32>
    %59 = vector.shape_cast %58 : vector<1x32x33xf32> to vector<32x33xf32>
    %60 = vector.extract_strided_slice %59 {offsets = [0, 0], sizes = [32, 32], strides = [1, 1]} : vector<32x33xf32> to vector<32x32xf32>
    %cst_24 = arith.constant dense<0.000000e+00> : vector<32x512xf32>
    %61 = tpu.matmul %60, %57, %cst_24 {dimension_numbers = #tpu.dot_dimension_numbers<[1], [0], [0], [1], [0, 0, 1, 1], [], []>} : vector<32x32xf32>, vector<32x512xf32>, vector<32x512xf32> -> vector<32x512xf32>
    %62 = vector.extract_strided_slice %59 {offsets = [0, 32], sizes = [32, 1], strides = [1, 1]} : vector<32x33xf32> to vector<32x1xf32>
    %63 = vector.broadcast %62 : vector<32x1xf32> to vector<32x512xf32>
    %64 = arith.addf %61, %63 : vector<32x512xf32>
    %65 = vector.extract_strided_slice %38 {offsets = [96, 0], sizes = [32, 512], strides = [1, 1]} : vector<128x512xf32> to vector<32x512xf32>
    %66 = arith.mulf %65, %64 : vector<32x512xf32>
    %c0_25 = arith.constant 0 : index
    %c0_26 = arith.constant 0 : index
    %67 = vector.load %arg4[%c0_25, %c0_26] : memref<4x33xf32, #tpu.memory_space<vmem>>, vector<4x33xf32>
    %68 = vector.extract_strided_slice %67 {offsets = [0, 0], sizes = [4, 32], strides = [1, 1]} : vector<4x33xf32> to vector<4x32xf32>
    %cst_27 = arith.constant dense<0.000000e+00> : vector<4x512xf32>
    %69 = tpu.matmul %68, %66, %cst_27 {dimension_numbers = #tpu.dot_dimension_numbers<[1], [0], [0], [1], [0, 0, 1, 1], [], []>} : vector<4x32xf32>, vector<32x512xf32>, vector<4x512xf32> -> vector<4x512xf32>
    %70 = vector.extract_strided_slice %67 {offsets = [0, 32], sizes = [4, 1], strides = [1, 1]} : vector<4x33xf32> to vector<4x1xf32>
    %71 = vector.broadcast %70 : vector<4x1xf32> to vector<4x512xf32>
    %72 = arith.addf %69, %71 : vector<4x512xf32>
    %c0_28 = arith.constant 0 : index
    %c0_29 = arith.constant 0 : index
    %73 = vector.load %arg5[%c0_28, %c0_29] : memref<4x512xf32, #tpu.memory_space<vmem>>, vector<4x512xf32>
    tpu.vector_store %arg5[%c0_28, %c0_29], %72 {strides = array<i32>} : memref<4x512xf32, #tpu.memory_space<vmem>>, vector<4x512xf32>,
    return
  }
  func.func @transform_0(%arg0: i32) -> (i32, i32) {
    %c0_i32 = arith.constant 0 : i32
    %c0_i32_0 = arith.constant 0 : i32
    return %c0_i32, %arg0 : i32, i32
  }
  func.func @transform_1(%arg0: i32) -> (i32, i32) {
    %c0_i32 = arith.constant 0 : i32
    %c0_i32_0 = arith.constant 0 : i32
    %c0_i32_1 = arith.constant 0 : i32
    return %c0_i32, %c0_i32_0 : i32, i32
  }
  func.func @transform_2(%arg0: i32) -> (i32, i32, i32) {
    %c0_i32 = arith.constant 0 : i32
    %c0_i32_0 = arith.constant 0 : i32
    %c0_i32_1 = arith.constant 0 : i32
    %c0_i32_2 = arith.constant 0 : i32
    return %c0_i32, %c0_i32_0, %c0_i32_1 : i32, i32, i32
  }
  func.func @transform_3(%arg0: i32) -> (i32, i32) {
    %c0_i32 = arith.constant 0 : i32
    %c0_i32_0 = arith.constant 0 : i32
    %c0_i32_1 = arith.constant 0 : i32
    return %c0_i32, %c0_i32_0 : i32, i32
  }
  func.func @transform_4(%arg0: i32) -> (i32, i32) {
    %c0_i32 = arith.constant 0 : i32
    %c0_i32_0 = arith.constant 0 : i32
    return %c0_i32, %arg0 : i32, i32
  }
}

</mosaic_0001>

<llo_original>
// kernel: mfn_forward_cf.1
$region0: #{mfn_forward_cf.1}
  #allocation0 [shape = 'u32[]', space=smem, size = 0x4, offset = 0x4, fixed_abs, tag = 'smem constant byte address 0x4 - core index']
  #allocation1 [shape = 'u32[144,128]{1,0:T(1,128)}', space=vmem, size = 0x12000, scoped, tag = 'internal scratch']
  %s0 = inlined_call_operand.vmem [shape: f32[3,2048], index: 0, kind: input, shape index: {}]
  %s1 = inlined_call_operand.vmem [shape: f32[128,3], index: 1, kind: input, shape index: {}]
  %s2 = inlined_call_operand.vmem [shape: f32[3,32,33], index: 2, kind: input, shape index: {}]
  %s3 = inlined_call_operand.vmem [shape: f32[4,33], index: 3, kind: input, shape index: {}]
  %s4 = inlined_call_operand.hbm [shape: f32[4,2048], index: 4, kind: output, shape index: {}]
  %s5 = sld [smem:[#allocation0]]
  $region49: #{mfn_forward_cf.1} parent=0
    _
  %s7 = ssub.s32 1, %s5
  %s8 = scalar_select 0, %s7, %s5
  $region1: #{mfn_forward_cf.1} parent=0
    #allocation2 [shape = 'u8[16384]{0}', space=vmem, size = 0x4000, scoped, tag = 'output window, operand 0']
    #allocation3 [shape = 's32[2]{0}', space=sflag, size = 0x8, scoped, tag = 'scoped memory for mfn_forward_cf.1']
    %9 = vsyncpa [#allocation3], 0
    %s10 = scalar_lea.sflag [#allocation3], 1
    %11 = vsyncpa %s10, 0
    loop: start=0, step=1, limit=6
    $region2: #{mfn_forward_cf.1} parent=1 // loop_pre_header
      _
    $region3: #{mfn_forward_cf.1} parent=1 // loop_header
      %s13 = sphi 0, %s17
      %p14 = scmp.ge.s32.totalorder %s13, 6
      %s23 = sphi 0, %s25
      %s26 = sphi 0, %s23
      %s27 = sphi 0, %s26
      %s43 = sphi 0, %s27
      %s47 = sphi 0, %s47
      %s49 = sphi 0, %s47
      %s50 = sphi 0, %s49
      %s64 = sphi 0, %s50
      %s68 = sphi 0, %s68
      %s70 = sphi 0, %s68
      %s71 = sphi 0, %s70
      %s85 = sphi 0, %s71
      %s89 = sphi 0, %s89
      %s91 = sphi 0, %s89
      %s92 = sphi 0, %s91
      %s106 = sphi 0, %s92
      %s112 = sphi 0, %s114
      %s115 = sphi 0, %s112
      %s116 = sphi 0, %s115
      %s132 = sphi 0, %s116
    $region4: #{mfn_forward_cf.1} parent=1 // loop_header_branch
      %16 = sbr.rel (%p14) target = $region8
    $region5: #{mfn_forward_cf.1} parent=1 // loop_body
      %s18 = ssub.s32 %s13, 1
      %s19 = ssub.s32 %s13, 2
      %s20 = sadd.s32 %s13, 1
      %s21 = ssub.s32 %s13, %s20
      %p22 = scmp.eq.s32.totalorder %s21, 0
      %s24 = sadd.s32 %s23, 1
      %s25 = scalar_select %p22, %s23, %s24
      %p28 = pneg %p22
      %p29 = scmp.eq.s32.totalorder %s13, 3
      %p30 = por %p28, %p29
      %p31 = scmp.ne.s32.totalorder %s23, %s26
      %p32 = scmp.eq.s32.totalorder %s13, 0
      %p33 = por %p31, %p32
      %p34 = scmp.ne.s32.totalorder %s23, %s26
      %p35 = scmp.eq.s32.totalorder %s18, 3
      %p36 = por %p34, %p35
      %p37 = scmp.ne.s32.totalorder %s26, %s27
      %p38 = scmp.eq.s32.totalorder %s18, 0
      %p39 = por %p37, %p38
      %p40 = scmp.ne.s32.totalorder %s26, %s27
      %p41 = scmp.eq.s32.totalorder %s19, 3
      %p42 = por %p40, %p41
      %p44 = scmp.ne.s32.totalorder %s27, %s43
      %p45 = scmp.eq.s32.totalorder %s19, 0
      %p46 = por %p44, %p45
      %s48 = sadd.s32 %s47, 1
      %p51 = scmp.eq.s32.totalorder %s13, 3
      %p52 = scmp.ne.s32.totalorder %s47, %s49
      %p53 = scmp.eq.s32.totalorder %s13, 0
      %p54 = por %p52, %p53
      %p55 = scmp.ne.s32.totalorder %s47, %s49
      %p56 = scmp.eq.s32.totalorder %s18, 3
      %p57 = por %p55, %p56
      %p58 = scmp.ne.s32.totalorder %s49, %s50
      %p59 = scmp.eq.s32.totalorder %s18, 0
      %p60 = por %p58, %p59
      %p61 = scmp.ne.s32.totalorder %s49, %s50
      %p62 = scmp.eq.s32.totalorder %s19, 3
      %p63 = por %p61, %p62
      %p65 = scmp.ne.s32.totalorder %s50, %s64
      %p66 = scmp.eq.s32.totalorder %s19, 0
      %p67 = por %p65, %p66
      %s69 = sadd.s32 %s68, 1
      %p72 = scmp.eq.s32.totalorder %s13, 3
      %p73 = scmp.ne.s32.totalorder %s68, %s70
      %p74 = scmp.eq.s32.totalorder %s13, 0
      %p75 = por %p73, %p74
      %p76 = scmp.ne.s32.totalorder %s68, %s70
      %p77 = scmp.eq.s32.totalorder %s18, 3
      %p78 = por %p76, %p77
      %p79 = scmp.ne.s32.totalorder %s70, %s71
      %p80 = scmp.eq.s32.totalorder %s18, 0
      %p81 = por %p79, %p80
      %p82 = scmp.ne.s32.totalorder %s70, %s71
      %p83 = scmp.eq.s32.totalorder %s19, 3
      %p84 = por %p82, %p83
      %p86 = scmp.ne.s32.totalorder %s71, %s85
      %p87 = scmp.eq.s32.totalorder %s19, 0
      %p88 = por %p86, %p87
      %s90 = sadd.s32 %s89, 1
      %p93 = scmp.eq.s32.totalorder %s13, 3
      %p94 = scmp.ne.s32.totalorder %s89, %s91
      %p95 = scmp.eq.s32.totalorder %s13, 0
      %p96 = por %p94, %p95
      %p97 = scmp.ne.s32.totalorder %s89, %s91
      %p98 = scmp.eq.s32.totalorder %s18, 3
      %p99 = por %p97, %p98
      %p100 = scmp.ne.s32.totalorder %s91, %s92
      %p101 = scmp.eq.s32.totalorder %s18, 0
      %p102 = por %p100, %p101
      %p103 = scmp.ne.s32.totalorder %s91, %s92
      %p104 = scmp.eq.s32.totalorder %s19, 3
      %p105 = por %p103, %p104
      %p107 = scmp.ne.s32.totalorder %s92, %s106
      %p108 = scmp.eq.s32.totalorder %s19, 0
      %p109 = por %p107, %p108
      %s110 = ssub.s32 %s13, %s20
      %p111 = scmp.eq.s32.totalorder %s110, 0
      %s113 = sadd.s32 %s112, 1
      %s114 = scalar_select %p111, %s112, %s113
      %p117 = pneg %p111
      %p118 = scmp.eq.s32.totalorder %s13, 3
      %p119 = por %p117, %p118
      %p120 = scmp.ne.s32.totalorder %s112, %s115
      %p121 = scmp.eq.s32.totalorder %s13, 0
      %p122 = por %p120, %p121
      %p123 = scmp.ne.s32.totalorder %s112, %s115
      %p124 = scmp.eq.s32.totalorder %s18, 3
      %p125 = por %p123, %p124
      %p126 = scmp.ne.s32.totalorder %s115, %s116
      %p127 = scmp.eq.s32.totalorder %s18, 0
      %p128 = por %p126, %p127
      %p129 = scmp.ne.s32.totalorder %s115, %s116
      %p130 = scmp.eq.s32.totalorder %s19, 3
      %p131 = por %p129, %p130
      %p133 = scmp.ne.s32.totalorder %s116, %s132
      %p134 = scmp.eq.s32.totalorder %s19, 0
      %p135 = por %p133, %p134
      %p136 = scmp.le.s32.totalorder 1, %s13
      %p137 = scmp.lt.s32.totalorder %s13, 5
      %p138 = pnand %p136, %p137
      %p139 = pneg %p138
      // Predicated region
      $region9: #{mfn_forward_cf.1} parent=5 // pred_check
        _
      $region10: #{mfn_forward_cf.1} parent=5 // pred_check_branch
        %141 = sbr.rel (%p138) target = $region12
      $region11: #{mfn_forward_cf.1} parent=5 // pred_region
        %s142 = ssub.s32 %s13, 1
        // Predicated region
        $region13: #{mfn_forward_cf.1} parent=11 // pred_check
          %p143 = pneg %p60
        $region14: #{mfn_forward_cf.1} parent=11 // pred_check_branch
          %145 = sbr.rel (%p143) target = $region16
        $region15: #{mfn_forward_cf.1} parent=11 // pred_region
          _
        $region16: #{mfn_forward_cf.1} parent=11 // pred_fallthru
          _
        // Predicated region
        $region17: #{mfn_forward_cf.1} parent=11 // pred_check
          %p146 = pneg %p81
        $region18: #{mfn_forward_cf.1} parent=11 // pred_check_branch
          %148 = sbr.rel (%p146) target = $region20
        $region19: #{mfn_forward_cf.1} parent=11 // pred_region
          _
        $region20: #{mfn_forward_cf.1} parent=11 // pred_fallthru
          _
        // Predicated region
        $region21: #{mfn_forward_cf.1} parent=11 // pred_check
          %p149 = pneg %p102
        $region22: #{mfn_forward_cf.1} parent=11 // pred_check_branch
          %151 = sbr.rel (%p149) target = $region24
        $region23: #{mfn_forward_cf.1} parent=11 // pred_region
          _
        $region24: #{mfn_forward_cf.1} parent=11 // pred_fallthru
          _
      $region12: #{mfn_forward_cf.1} parent=5 // pred_fallthru
        _
      %p152 = scmp.lt.s32.totalorder %s13, 4
      // Predicated region
      $region25: #{mfn_forward_cf.1} parent=5 // pred_check
        %p153 = pneg %p152
      $region26: #{mfn_forward_cf.1} parent=5 // pred_check_branch
        %155 = sbr.rel (%p153) target = $region28
      $region27: #{mfn_forward_cf.1} parent=5 // pred_region
        // Predicated region
        $region29: #{mfn_forward_cf.1} parent=27 // pred_check
          %p156 = pneg %p33
        $region30: #{mfn_forward_cf.1} parent=27 // pred_check_branch
          %158 = sbr.rel (%p156) target = $region32
        $region31: #{mfn_forward_cf.1} parent=27 // pred_region
          %s159 = smul.u32 4, %s13
          %p160 = scmp.lt.s32.totalorder %s159, 15
          %s161 = scalar_select %p160, %s159, 15
          %s162 = smul.addr %s161, 4
          %s163 = scalar_lea.vmem %s0, %s162
          %s164 = smul.u32 4, %s13
        $region32: #{mfn_forward_cf.1} parent=27 // pred_fallthru
          _
      $region28: #{mfn_forward_cf.1} parent=5 // pred_fallthru
        _
      %p165 = scmp.le.s32.totalorder 1, %s13
      %p166 = scmp.lt.s32.totalorder %s13, 5
      %p167 = pnand %p165, %p166
      %p168 = pneg %p167
      // Predicated region
      $region33: #{mfn_forward_cf.1} parent=5 // pred_check
        _
      $region34: #{mfn_forward_cf.1} parent=5 // pred_check_branch
        %170 = sbr.rel (%p167) target = $region36
      $region35: #{mfn_forward_cf.1} parent=5 // pred_region
        %s171 = ssub.s32 %s13, 1
        %s172 = smul.u32 4, %s18
        %p173 = scmp.lt.s32.totalorder %s172, 15
        %s174 = scalar_select %p173, %s172, 15
        %s175 = smul.addr %s174, 4
        %s176 = scalar_lea.vmem %s0, %s175
        %p177 = pneg %p39
        %p178 = pneg %p36
        %p179 = pneg %p60
        %p180 = pneg %p57
        %p181 = pneg %p81
        %p182 = pneg %p78
        %p183 = pneg %p102
        %p184 = pneg %p99
        %p185 = pneg %p128
        %p186 = pneg %p125
        %s187 = sand.u32 %s115, 1
        %s188 = scalar_lea.sflag [#allocation3], %s187
        %s189 = sand.u32 %s115, 1
        %s190 = smul.addr %s189, 16
        %s191 = scalar_lea.vmem [#allocation2], %s190
        %s192 = smul.u32 4, %s18
        %p193 = scmp.lt.s32.totalorder %s192, 15
        %s194 = scalar_select %p193, %s192, 15
        %s195 = smul.addr %s194, 4
        %s196 = scalar_lea.vmem %s0, %s195
        %s197 = smul.u32 4, %s18
        %s198 = smul.u32 4, %s18
        %v199 = vld [vmem:[%s196] sm:$0x77]
        %v200 = vld [vmem:[%s196 + $0x8] sm:$0x77]
        %v201 = vld [vmem:[%s1] sm:$0xff]
        %v202 = vld [vmem:[%s1 + $0x8] sm:$0xff]
        %v203 = vld [vmem:[%s1 + $0x10] sm:$0xff]
        %v204 = vld [vmem:[%s1 + $0x18] sm:$0xff]
        %v205 = vld [vmem:[%s1 + $0x20] sm:$0xff]
        %v206 = vld [vmem:[%s1 + $0x28] sm:$0xff]
        %v207 = vld [vmem:[%s1 + $0x30] sm:$0xff]
        %v208 = vld [vmem:[%s1 + $0x38] sm:$0xff]
        %v209 = vld [vmem:[%s1 + $0x40] sm:$0xff]
        %v210 = vld [vmem:[%s1 + $0x48] sm:$0xff]
        %v211 = vld [vmem:[%s1 + $0x50] sm:$0xff]
        %v212 = vld [vmem:[%s1 + $0x58] sm:$0xff]
        %v213 = vld [vmem:[%s1 + $0x60] sm:$0xff]
        %v214 = vld [vmem:[%s1 + $0x68] sm:$0xff]
        %v215 = vld [vmem:[%s1 + $0x70] sm:$0xff]
        %v216 = vld [vmem:[%s1 + $0x78] sm:$0xff]
        %v219 = vcombine.high %v199, %v199
        %v220 = vcombine.high %v200, %v200
        %vm221 = vcmask 23552
        %v223 = vsel %vm221, %v201, 0
        %v226 = vsel %vm221, %v202, 0
        %v229 = vsel %vm221, %v203, 0
        %v232 = vsel %vm221, %v204, 0
        %v235 = vsel %vm221, %v205, 0
        %v238 = vsel %vm221, %v206, 0
        %v241 = vsel %vm221, %v207, 0
        %v244 = vsel %vm221, %v208, 0
        %v247 = vsel %vm221, %v209, 0
        %v250 = vsel %vm221, %v210, 0
        %v253 = vsel %vm221, %v211, 0
        %v256 = vsel %vm221, %v212, 0
        %v259 = vsel %vm221, %v213, 0
        %v262 = vsel %vm221, %v214, 0
        %v265 = vsel %vm221, %v215, 0
        %v268 = vsel %vm221, %v216, 0
        %vm270 = vcmask 1042432
        %v271 = vsel %vm270, %v199, 0
        %v273 = vsel %vm270, %v219, 0
        %v275 = vsel %vm270, %v200, 0
        %v277 = vsel %vm270, %v220, 0
        %279 = vmatprep.subr.mxu0 %v273
        %280 = vmatpush1.msra.mxu0 %v271
        %281 = vmatprep.subr.mxu0 0.0
        %282 = vmatpush1.msra.mxu0 0.0
        %283 = vmatprep.subr.mxu0 0.0
        %284 = vmatpush1.msra.mxu0 0.0
        %285 = vmatprep.subr.mxu0 0.0
        %286 = vmatpush1.msra.mxu0 0.0
        %287 = vmatprep.subr.mxu0 0.0
        %288 = vmatpush1.msra.mxu0 0.0
        %289 = vmatprep.subr.mxu0 0.0
        %290 = vmatpush1.msra.mxu0 0.0
        %291 = vmatprep.subr.mxu0 0.0
        %292 = vmatpush1.msra.mxu0 0.0
        %293 = vmatprep.subr.mxu0 0.0
        %294 = vmatpush1.msra.mxu0 0.0
        %295 = vmatprep.subr.mxu0 0.0
        %296 = vmatpush1.msra.mxu0 0.0
        %297 = vmatprep.subr.mxu0 0.0
        %298 = vmatpush1.msra.mxu0 0.0
        %299 = vmatprep.subr.mxu0 0.0
        %300 = vmatpush1.msra.mxu0 0.0
        %301 = vmatprep.subr.mxu0 0.0
        %302 = vmatpush1.msra.mxu0 0.0
        %303 = vmatprep.subr.mxu0 0.0
        %304 = vmatpush1.msra.mxu0 0.0
        %305 = vmatprep.subr.mxu0 0.0
        %306 = vmatpush1.msra.mxu0 0.0
        %307 = vmatprep.subr.mxu0 0.0
        %308 = vmatpush1.msra.mxu0 0.0
        %309 = vmatprep.subr.mxu0 0.0
        %310 = vmatpush1.msra.mxu0 0.0
        %311 = vmatprep.subr.mxu0 0.0
        %312 = vmatpush1.msra.mxu0 0.0
        %313 = vmatprep.subr.mxu0 0.0
        %314 = vmatpush1.msra.mxu0 0.0
        %315 = vmatprep.subr.mxu0 0.0
        %316 = vmatpush1.msra.mxu0 0.0
        %317 = vmatprep.subr.mxu0 0.0
        %318 = vmatpush1.msra.mxu0 0.0
        %319 = vmatprep.subr.mxu0 0.0
        %320 = vmatpush1.msra.mxu0 0.0
        %321 = vmatprep.subr.mxu0 0.0
        %322 = vmatpush1.msra.mxu0 0.0
        %323 = vmatprep.subr.mxu0 0.0
        %324 = vmatpush1.msra.mxu0 0.0
        %325 = vmatprep.subr.mxu0 0.0
        %326 = vmatpush1.msra.mxu0 0.0
        %327 = vmatprep.subr.mxu0 0.0
        %328 = vmatpush1.msra.mxu0 0.0
        %329 = vmatprep.subr.mxu0 0.0
        %330 = vmatpush1.msra.mxu0 0.0
        %331 = vmatprep.subr.mxu0 0.0
        %332 = vmatpush1.msra.mxu0 0.0
        %333 = vmatprep.subr.mxu0 0.0
        %334 = vmatpush1.msra.mxu0 0.0
        %335 = vmatprep.subr.mxu0 0.0
        %336 = vmatpush1.msra.mxu0 0.0
        %337 = vmatprep.subr.mxu0 0.0
        %338 = vmatpush1.msra.mxu0 0.0
        %339 = vmatprep.subr.mxu0 0.0
        %340 = vmatpush1.msra.mxu0 0.0
        %341 = vmatprep.subr.mxu0 0.0
        %342 = vmatpush1.msra.mxu0 0.0
        %343 = vmatprep.mubr.f32.mxu0 0.0
        %344 = vmatmul.mubr.f32.gmra.mrb[0].mxu0 %v223
        %v345 = vpop.f32.mrb[0].mxu0
        %v346 = vadd.f32 0.0, %v345
        %v347 = vpop.f32.mrb[0].mxu0
        %v348 = vadd.f32 0.0, %v347
        %349 = vmatprep.mubr.f32.mxu0 0.0
        %350 = vmatmul.mubr.f32.gmra.mrb[0].mxu0 %v226
        %v351 = vpop.f32.mrb[0].mxu0
        %v352 = vadd.f32 0.0, %v351
        %v353 = vpop.f32.mrb[0].mxu0
        %v354 = vadd.f32 0.0, %v353
        %355 = vmatprep.mubr.f32.mxu0 0.0
        %356 = vmatmul.mubr.f32.gmra.mrb[0].mxu0 %v229
        %v357 = vpop.f32.mrb[0].mxu0
        %v358 = vadd.f32 0.0, %v357
        %v359 = vpop.f32.mrb[0].mxu0
        %v360 = vadd.f32 0.0, %v359
        %361 = vmatprep.mubr.f32.mxu0 0.0
        %362 = vmatmul.mubr.f32.gmra.mrb[0].mxu0 %v232
        %v363 = vpop.f32.mrb[0].mxu0
        %v364 = vadd.f32 0.0, %v363
        %v365 = vpop.f32.mrb[0].mxu0
        %v366 = vadd.f32 0.0, %v365
        %367 = vmatprep.mubr.f32.mxu0 0.0
        %368 = vmatmul.mubr.f32.gmra.mrb[0].mxu0 %v235
        %v369 = vpop.f32.mrb[0].mxu0
        %v370 = vadd.f32 0.0, %v369
        %v371 = vpop.f32.mrb[0].mxu0
        %v372 = vadd.f32 0.0, %v371
        %373 = vmatprep.mubr.f32.mxu0 0.0
        %374 = vmatmul.mubr.f32.gmra.mrb[0].mxu0 %v238
        %v375 = vpop.f32.mrb[0].mxu0
        %v376 = vadd.f32 0.0, %v375
        %v377 = vpop.f32.mrb[0].mxu0
        %v378 = vadd.f32 0.0, %v377
        %379 = vmatprep.mubr.f32.mxu0 0.0
        %380 = vmatmul.mubr.f32.gmra.mrb[0].mxu0 %v241
        %v381 = vpop.f32.mrb[0].mxu0
        %v382 = vadd.f32 0.0, %v381
        %v383 = vpop.f32.mrb[0].mxu0
        %v384 = vadd.f32 0.0, %v383
        %385 = vmatprep.mubr.f32.mxu0 0.0
        %386 = vmatmul.mubr.f32.gmra.mrb[0].mxu0 %v244
        %v387 = vpop.f32.mrb[0].mxu0
        %v388 = vadd.f32 0.0, %v387
        %v389 = vpop.f32.mrb[0].mxu0
        %v390 = vadd.f32 0.0, %v389
        %391 = vmatprep.mubr.f32.mxu0 0.0
        %392 = vmatmul.mubr.f32.gmra.mrb[0].mxu0 %v247
        %v393 = vpop.f32.mrb[0].mxu0
        %v394 = vadd.f32 0.0, %v393
        %v395 = vpop.f32.mrb[0].mxu0
        %v396 = vadd.f32 0.0, %v395
        %397 = vmatprep.mubr.f32.mxu0 0.0
        %398 = vmatmul.mubr.f32.gmra.mrb[0].mxu0 %v250
        %v399 = vpop.f32.mrb[0].mxu0
        %v400 = vadd.f32 0.0, %v399
        %v401 = vpop.f32.mrb[0].mxu0
        %v402 = vadd.f32 0.0, %v401
        %403 = vmatprep.mubr.f32.mxu0 0.0
        %404 = vmatmul.mubr.f32.gmra.mrb[0].mxu0 %v253
        %v405 = vpop.f32.mrb[0].mxu0
        %v406 = vadd.f32 0.0, %v405
        %v407 = vpop.f32.mrb[0].mxu0
        %v408 = vadd.f32 0.0, %v407
        %409 = vmatprep.mubr.f32.mxu0 0.0
        %410 = vmatmul.mubr.f32.gmra.mrb[0].mxu0 %v256
        %v411 = vpop.f32.mrb[0].mxu0
        %v412 = vadd.f32 0.0, %v411
        %v413 = vpop.f32.mrb[0].mxu0
        %v414 = vadd.f32 0.0, %v413
        %415 = vmatprep.mubr.f32.mxu0 0.0
        %416 = vmatmul.mubr.f32.gmra.mrb[0].mxu0 %v259
        %v417 = vpop.f32.mrb[0].mxu0
        %v418 = vadd.f32 0.0, %v417
        %v419 = vpop.f32.mrb[0].mxu0
        %v420 = vadd.f32 0.0, %v419
        %421 = vmatprep.mubr.f32.mxu0 0.0
        %422 = vmatmul.mubr.f32.gmra.mrb[0].mxu0 %v262
        %v423 = vpop.f32.mrb[0].mxu0
        %v424 = vadd.f32 0.0, %v423
        %v425 = vpop.f32.mrb[0].mxu0
        %v426 = vadd.f32 0.0, %v425
        %427 = vmatprep.mubr.f32.mxu0 0.0
        %428 = vmatmul.mubr.f32.gmra.mrb[0].mxu0 %v265
        %v429 = vpop.f32.mrb[0].mxu0
        %v430 = vadd.f32 0.0, %v429
        %v431 = vpop.f32.mrb[0].mxu0
        %v432 = vadd.f32 0.0, %v431
        %433 = vmatprep.mubr.f32.mxu0 0.0
        %434 = vmatmul.mubr.f32.gmra.mrb[0].mxu0 %v268
        %v435 = vpop.f32.mrb[0].mxu0
        %v436 = vadd.f32 0.0, %v435
        %v437 = vpop.f32.mrb[0].mxu0
        %v438 = vadd.f32 0.0, %v437
        %439 = vdwg.mxu0
        %440 = vmatprep.subr.mxu0 %v277
        %441 = vmatpush1.msra.mxu0 %v275
        %442 = vmatprep.subr.mxu0 0.0
        %443 = vmatpush1.msra.mxu0 0.0
        %444 = vmatprep.subr.mxu0 0.0
        %445 = vmatpush1.msra.mxu0 0.0
        %446 = vmatprep.subr.mxu0 0.0
        %447 = vmatpush1.msra.mxu0 0.0
        %448 = vmatprep.subr.mxu0 0.0
        %449 = vmatpush1.msra.mxu0 0.0
        %450 = vmatprep.subr.mxu0 0.0
        %451 = vmatpush1.msra.mxu0 0.0
        %452 = vmatprep.subr.mxu0 0.0
        %453 = vmatpush1.msra.mxu0 0.0
        %454 = vmatprep.subr.mxu0 0.0
        %455 = vmatpush1.msra.mxu0 0.0
        %456 = vmatprep.subr.mxu0 0.0
        %457 = vmatpush1.msra.mxu0 0.0
        %458 = vmatprep.subr.mxu0 0.0
        %459 = vmatpush1.msra.mxu0 0.0
        %460 = vmatprep.subr.mxu0 0.0
        %461 = vmatpush1.msra.mxu0 0.0
        %462 = vmatprep.subr.mxu0 0.0
        %463 = vmatpush1.msra.mxu0 0.0
        %464 = vmatprep.subr.mxu0 0.0
        %465 = vmatpush1.msra.mxu0 0.0
        %466 = vmatprep.subr.mxu0 0.0
        %467 = vmatpush1.msra.mxu0 0.0
        %468 = vmatprep.subr.mxu0 0.0
        %469 = vmatpush1.msra.mxu0 0.0
        %470 = vmatprep.subr.mxu0 0.0
        %471 = vmatpush1.msra.mxu0 0.0
        %472 = vmatprep.subr.mxu0 0.0
        %473 = vmatpush1.msra.mxu0 0.0
        %474 = vmatprep.subr.mxu0 0.0
        %475 = vmatpush1.msra.mxu0 0.0
        %476 = vmatprep.subr.mxu0 0.0
        %477 = vmatpush1.msra.mxu0 0.0
        %478 = vmatprep.subr.mxu0 0.0
        %479 = vmatpush1.msra.mxu0 0.0
        %480 = vmatprep.subr.mxu0 0.0
        %481 = vmatpush1.msra.mxu0 0.0
        %482 = vmatprep.subr.mxu0 0.0
        %483 = vmatpush1.msra.mxu0 0.0
        %484 = vmatprep.subr.mxu0 0.0
        %485 = vmatpush1.msra.mxu0 0.0
        %486 = vmatprep.subr.mxu0 0.0
        %487 = vmatpush1.msra.mxu0 0.0
        %488 = vmatprep.subr.mxu0 0.0
        %489 = vmatpush1.msra.mxu0 0.0
        %490 = vmatprep.subr.mxu0 0.0
        %491 = vmatpush1.msra.mxu0 0.0
        %492 = vmatprep.subr.mxu0 0.0
        %493 = vmatpush1.msra.mxu0 0.0
        %494 = vmatprep.subr.mxu0 0.0
        %495 = vmatpush1.msra.mxu0 0.0
        %496 = vmatprep.subr.mxu0 0.0
        %497 = vmatpush1.msra.mxu0 0.0
        %498 = vmatprep.subr.mxu0 0.0
        %499 = vmatpush1.msra.mxu0 0.0
        %500 = vmatprep.subr.mxu0 0.0
        %501 = vmatpush1.msra.mxu0 0.0
        %502 = vmatprep.subr.mxu0 0.0
        %503 = vmatpush1.msra.mxu0 0.0
        %504 = vmatprep.mubr.f32.mxu0 0.0
        %505 = vmatmul.mubr.f32.gmra.mrb[0].mxu0 %v223
        %v506 = vpop.f32.mrb[0].mxu0
        %v507 = vadd.f32 0.0, %v506
        %v508 = vpop.f32.mrb[0].mxu0
        %v509 = vadd.f32 0.0, %v508
        %510 = vmatprep.mubr.f32.mxu0 0.0
        %511 = vmatmul.mubr.f32.gmra.mrb[0].mxu0 %v226
        %v512 = vpop.f32.mrb[0].mxu0
        %v513 = vadd.f32 0.0, %v512
        %v514 = vpop.f32.mrb[0].mxu0
        %v515 = vadd.f32 0.0, %v514
        %516 = vmatprep.mubr.f32.mxu0 0.0
        %517 = vmatmul.mubr.f32.gmra.mrb[0].mxu0 %v229
        %v518 = vpop.f32.mrb[0].mxu0
        %v519 = vadd.f32 0.0, %v518
        %v520 = vpop.f32.mrb[0].mxu0
        %v521 = vadd.f32 0.0, %v520
        %522 = vmatprep.mubr.f32.mxu0 0.0
        %523 = vmatmul.mubr.f32.gmra.mrb[0].mxu0 %v232
        %v524 = vpop.f32.mrb[0].mxu0
        %v525 = vadd.f32 0.0, %v524
        %v526 = vpop.f32.mrb[0].mxu0
        %v527 = vadd.f32 0.0, %v526
        %528 = vmatprep.mubr.f32.mxu0 0.0
        %529 = vmatmul.mubr.f32.gmra.mrb[0].mxu0 %v235
        %v530 = vpop.f32.mrb[0].mxu0
        %v531 = vadd.f32 0.0, %v530
        %v532 = vpop.f32.mrb[0].mxu0
        %v533 = vadd.f32 0.0, %v532
        %534 = vmatprep.mubr.f32.mxu0 0.0
        %535 = vmatmul.mubr.f32.gmra.mrb[0].mxu0 %v238
        %v536 = vpop.f32.mrb[0].mxu0
        %v537 = vadd.f32 0.0, %v536
        %v538 = vpop.f32.mrb[0].mxu0
        %v539 = vadd.f32 0.0, %v538
        %540 = vmatprep.mubr.f32.mxu0 0.0
        %541 = vmatmul.mubr.f32.gmra.mrb[0].mxu0 %v241
        %v542 = vpop.f32.mrb[0].mxu0
        %v543 = vadd.f32 0.0, %v542
        %v544 = vpop.f32.mrb[0].mxu0
        %v545 = vadd.f32 0.0, %v544
        %546 = vmatprep.mubr.f32.mxu0 0.0
        %547 = vmatmul.mubr.f32.gmra.mrb[0].mxu0 %v244
        %v548 = vpop.f32.mrb[0].mxu0
        %v549 = vadd.f32 0.0, %v548
        %v550 = vpop.f32.mrb[0].mxu0
        %v551 = vadd.f32 0.0, %v550
        %552 = vmatprep.mubr.f32.mxu0 0.0
        %553 = vmatmul.mubr.f32.gmra.mrb[0].mxu0 %v247
        %v554 = vpop.f32.mrb[0].mxu0
        %v555 = vadd.f32 0.0, %v554
        %v556 = vpop.f32.mrb[0].mxu0
        %v557 = vadd.f32 0.0, %v556
        %558 = vmatprep.mubr.f32.mxu0 0.0
        %559 = vmatmul.mubr.f32.gmra.mrb[0].mxu0 %v250
        %v560 = vpop.f32.mrb[0].mxu0
        %v561 = vadd.f32 0.0, %v560
        %v562 = vpop.f32.mrb[0].mxu0
        %v563 = vadd.f32 0.0, %v562
        %564 = vmatprep.mubr.f32.mxu0 0.0
        %565 = vmatmul.mubr.f32.gmra.mrb[0].mxu0 %v253
        %v566 = vpop.f32.mrb[0].mxu0
        %v567 = vadd.f32 0.0, %v566
        %v568 = vpop.f32.mrb[0].mxu0
        %v569 = vadd.f32 0.0, %v568
        %570 = vmatprep.mubr.f32.mxu0 0.0
        %571 = vmatmul.mubr.f32.gmra.mrb[0].mxu0 %v256
        %v572 = vpop.f32.mrb[0].mxu0
        %v573 = vadd.f32 0.0, %v572
        %v574 = vpop.f32.mrb[0].mxu0
        %v575 = vadd.f32 0.0, %v574
        %576 = vmatprep.mubr.f32.mxu0 0.0
        %577 = vmatmul.mubr.f32.gmra.mrb[0].mxu0 %v259
        %v578 = vpop.f32.mrb[0].mxu0
        %v579 = vadd.f32 0.0, %v578
        %v580 = vpop.f32.mrb[0].mxu0
        %v581 = vadd.f32 0.0, %v580
        %582 = vmatprep.mubr.f32.mxu0 0.0
        %583 = vmatmul.mubr.f32.gmra.mrb[0].mxu0 %v262
        %v584 = vpop.f32.mrb[0].mxu0
        %v585 = vadd.f32 0.0, %v584
        %v586 = vpop.f32.mrb[0].mxu0
        %v587 = vadd.f32 0.0, %v586
        %588 = vmatprep.mubr.f32.mxu0 0.0
        %589 = vmatmul.mubr.f32.gmra.mrb[0].mxu0 %v265
        %v590 = vpop.f32.mrb[0].mxu0
        %v591 = vadd.f32 0.0, %v590
        %v592 = vpop.f32.mrb[0].mxu0
        %v593 = vadd.f32 0.0, %v592
        %594 = vmatprep.mubr.f32.mxu0 0.0
        %595 = vmatmul.mubr.f32.gmra.mrb[0].mxu0 %v268
        %v596 = vpop.f32.mrb[0].mxu0
        %v597 = vadd.f32 0.0, %v596
        %v598 = vpop.f32.mrb[0].mxu0
        %v599 = vadd.f32 0.0, %v598
        %600 = vdwg.mxu0
        %v601 = vmul.f32 %v346, 0.31830987
        %v602 = vmul.f32 %v348, 0.31830987
        %v603 = vmul.f32 %v507, 0.31830987
        %v604 = vmul.f32 %v509, 0.31830987
        %v605 = vmul.f32 %v352, 0.31830987
        %v606 = vmul.f32 %v354, 0.31830987
        %v607 = vmul.f32 %v513, 0.31830987
        %v608 = vmul.f32 %v515, 0.31830987
        %v609 = vmul.f32 %v358, 0.31830987
        %v610 = vmul.f32 %v360, 0.31830987
        %v611 = vmul.f32 %v519, 0.31830987
        %v612 = vmul.f32 %v521, 0.31830987
        %v613 = vmul.f32 %v364, 0.31830987
        %v614 = vmul.f32 %v366, 0.31830987
        %v615 = vmul.f32 %v525, 0.31830987
        %v616 = vmul.f32 %v527, 0.31830987
        %v617 = vmul.f32 %v370, 0.31830987
        %v618 = vmul.f32 %v372, 0.31830987
        %v619 = vmul.f32 %v531, 0.31830987
        %v620 = vmul.f32 %v533, 0.31830987
        %v621 = vmul.f32 %v376, 0.31830987
        %v622 = vmul.f32 %v378, 0.31830987
        %v623 = vmul.f32 %v537, 0.31830987
        %v624 = vmul.f32 %v539, 0.31830987
        %v625 = vmul.f32 %v382, 0.31830987
        %v626 = vmul.f32 %v384, 0.31830987
        %v627 = vmul.f32 %v543, 0.31830987
        %v628 = vmul.f32 %v545, 0.31830987
        %v629 = vmul.f32 %v388, 0.31830987
        %v630 = vmul.f32 %v390, 0.31830987
        %v631 = vmul.f32 %v549, 0.31830987
        %v632 = vmul.f32 %v551, 0.31830987
        %v633 = vmul.f32 %v394, 0.31830987
        %v634 = vmul.f32 %v396, 0.31830987
        %v635 = vmul.f32 %v555, 0.31830987
        %v636 = vmul.f32 %v557, 0.31830987
        %v637 = vmul.f32 %v400, 0.31830987
        %v638 = vmul.f32 %v402, 0.31830987
        %v639 = vmul.f32 %v561, 0.31830987
        %v640 = vmul.f32 %v563, 0.31830987
        %v641 = vmul.f32 %v406, 0.31830987
        %v642 = vmul.f32 %v408, 0.31830987
        %v643 = vmul.f32 %v567, 0.31830987
        %v644 = vmul.f32 %v569, 0.31830987
        %v645 = vmul.f32 %v412, 0.31830987
        %v646 = vmul.f32 %v414, 0.31830987
        %v647 = vmul.f32 %v573, 0.31830987
        %v648 = vmul.f32 %v575, 0.31830987
        %v649 = vmul.f32 %v418, 0.31830987
        %v650 = vmul.f32 %v420, 0.31830987
        %v651 = vmul.f32 %v579, 0.31830987
        %v652 = vmul.f32 %v581, 0.31830987
        %v653 = vmul.f32 %v424, 0.31830987
        %v654 = vmul.f32 %v426, 0.31830987
        %v655 = vmul.f32 %v585, 0.31830987
        %v656 = vmul.f32 %v587, 0.31830987
        %v657 = vmul.f32 %v430, 0.31830987
        %v658 = vmul.f32 %v432, 0.31830987
        %v659 = vmul.f32 %v591, 0.31830987
        %v660 = vmul.f32 %v593, 0.31830987
        %v661 = vmul.f32 %v436, 0.31830987
        %v662 = vmul.f32 %v438, 0.31830987
        %v663 = vmul.f32 %v597, 0.31830987
        %v664 = vmul.f32 %v599, 0.31830987
        %v665 = vadd.f32 %v601, 0.5
        %v666 = vadd.f32 %v602, 0.5
        %v667 = vadd.f32 %v603, 0.5
        %v668 = vadd.f32 %v604, 0.5
        %v669 = vadd.f32 %v605, 0.5
        %v670 = vadd.f32 %v606, 0.5
        %v671 = vadd.f32 %v607, 0.5
        %v672 = vadd.f32 %v608, 0.5
        %v673 = vadd.f32 %v609, 0.5
        %v674 = vadd.f32 %v610, 0.5
        %v675 = vadd.f32 %v611, 0.5
        %v676 = vadd.f32 %v612, 0.5
        %v677 = vadd.f32 %v613, 0.5
        %v678 = vadd.f32 %v614, 0.5
        %v679 = vadd.f32 %v615, 0.5
        %v680 = vadd.f32 %v616, 0.5
        %v681 = vadd.f32 %v617, 0.5
        %v682 = vadd.f32 %v618, 0.5
        %v683 = vadd.f32 %v619, 0.5
        %v684 = vadd.f32 %v620, 0.5
        %v685 = vadd.f32 %v621, 0.5
        %v686 = vadd.f32 %v622, 0.5
        %v687 = vadd.f32 %v623, 0.5
        %v688 = vadd.f32 %v624, 0.5
        %v689 = vadd.f32 %v625, 0.5
        %v690 = vadd.f32 %v626, 0.5
        %v691 = vadd.f32 %v627, 0.5
        %v692 = vadd.f32 %v628, 0.5
        %v693 = vadd.f32 %v629, 0.5
        %v694 = vadd.f32 %v630, 0.5
        %v695 = vadd.f32 %v631, 0.5
        %v696 = vadd.f32 %v632, 0.5
        %v697 = vadd.f32 %v633, 0.5
        %v698 = vadd.f32 %v634, 0.5
        %v699 = vadd.f32 %v635, 0.5
        %v700 = vadd.f32 %v636, 0.5
        %v701 = vadd.f32 %v637, 0.5
        %v702 = vadd.f32 %v638, 0.5
        %v703 = vadd.f32 %v639, 0.5
        %v704 = vadd.f32 %v640, 0.5
        %v705 = vadd.f32 %v641, 0.5
        %v706 = vadd.f32 %v642, 0.5
        %v707 = vadd.f32 %v643, 0.5
        %v708 = vadd.f32 %v644, 0.5
        %v709 = vadd.f32 %v645, 0.5
        %v710 = vadd.f32 %v646, 0.5
        %v711 = vadd.f32 %v647, 0.5
        %v712 = vadd.f32 %v648, 0.5
        %v713 = vadd.f32 %v649, 0.5
        %v714 = vadd.f32 %v650, 0.5
        %v715 = vadd.f32 %v651, 0.5
        %v716 = vadd.f32 %v652, 0.5
        %v717 = vadd.f32 %v653, 0.5
        %v718 = vadd.f32 %v654, 0.5
        %v719 = vadd.f32 %v655, 0.5
        %v720 = vadd.f32 %v656, 0.5
        %v721 = vadd.f32 %v657, 0.5
        %v722 = vadd.f32 %v658, 0.5
        %v723 = vadd.f32 %v659, 0.5
        %v724 = vadd.f32 %v660, 0.5
        %v725 = vadd.f32 %v661, 0.5
        %v726 = vadd.f32 %v662, 0.5
        %v727 = vadd.f32 %v663, 0.5
        %v728 = vadd.f32 %v664, 0.5
        %v729 = vfloor.f32 %v665
        %v730 = vfloor.f32 %v666
        %v731 = vfloor.f32 %v667
        %v732 = vfloor.f32 %v668
        %v733 = vfloor.f32 %v669
        %v734 = vfloor.f32 %v670
        %v735 = vfloor.f32 %v671
        %v736 = vfloor.f32 %v672
        %v737 = vfloor.f32 %v673
        %v738 = vfloor.f32 %v674
        %v739 = vfloor.f32 %v675
        %v740 = vfloor.f32 %v676
        %v741 = vfloor.f32 %v677
        %v742 = vfloor.f32 %v678
        %v743 = vfloor.f32 %v679
        %v744 = vfloor.f32 %v680
        %v745 = vfloor.f32 %v681
        %v746 = vfloor.f32 %v682
        %v747 = vfloor.f32 %v683
        %v748 = vfloor.f32 %v684
        %v749 = vfloor.f32 %v685
        %v750 = vfloor.f32 %v686
        %v751 = vfloor.f32 %v687
        %v752 = vfloor.f32 %v688
        %v753 = vfloor.f32 %v689
        %v754 = vfloor.f32 %v690
        %v755 = vfloor.f32 %v691
        %v756 = vfloor.f32 %v692
        %v757 = vfloor.f32 %v693
        %v758 = vfloor.f32 %v694
        %v759 = vfloor.f32 %v695
        %v760 = vfloor.f32 %v696
        %v761 = vfloor.f32 %v697
        %v762 = vfloor.f32 %v698
        %v763 = vfloor.f32 %v699
        %v764 = vfloor.f32 %v700
        %v765 = vfloor.f32 %v701
        %v766 = vfloor.f32 %v702
        %v767 = vfloor.f32 %v703
        %v768 = vfloor.f32 %v704
        %v769 = vfloor.f32 %v705
        %v770 = vfloor.f32 %v706
        %v771 = vfloor.f32 %v707
        %v772 = vfloor.f32 %v708
        %v773 = vfloor.f32 %v709
        %v774 = vfloor.f32 %v710
        %v775 = vfloor.f32 %v711
        %v776 = vfloor.f32 %v712
        %v777 = vfloor.f32 %v713
        %v778 = vfloor.f32 %v714
        %v779 = vfloor.f32 %v715
        %v780 = vfloor.f32 %v716
        %v781 = vfloor.f32 %v717
        %v782 = vfloor.f32 %v718
        %v783 = vfloor.f32 %v719
        %v784 = vfloor.f32 %v720
        %v785 = vfloor.f32 %v721
        %v786 = vfloor.f32 %v722
        %v787 = vfloor.f32 %v723
        %v788 = vfloor.f32 %v724
        %v789 = vfloor.f32 %v725
        %v790 = vfloor.f32 %v726
        %v791 = vfloor.f32 %v727
        %v792 = vfloor.f32 %v728
        %v793 = vmul.f32 %v729, 3.140625
        %v794 = vmul.f32 %v730, 3.140625
        %v795 = vmul.f32 %v731, 3.140625
        %v796 = vmul.f32 %v732, 3.140625
        %v797 = vmul.f32 %v733, 3.140625
        %v798 = vmul.f32 %v734, 3.140625
        %v799 = vmul.f32 %v735, 3.140625
        %v800 = vmul.f32 %v736, 3.140625
        %v801 = vmul.f32 %v737, 3.140625
        %v802 = vmul.f32 %v738, 3.140625
        %v803 = vmul.f32 %v739, 3.140625
        %v804 = vmul.f32 %v740, 3.140625
        %v805 = vmul.f32 %v741, 3.140625
        %v806 = vmul.f32 %v742, 3.140625
        %v807 = vmul.f32 %v743, 3.140625
        %v808 = vmul.f32 %v744, 3.140625
        %v809 = vmul.f32 %v745, 3.140625
        %v810 = vmul.f32 %v746, 3.140625
        %v811 = vmul.f32 %v747, 3.140625
        %v812 = vmul.f32 %v748, 3.140625
        %v813 = vmul.f32 %v749, 3.140625
        %v814 = vmul.f32 %v750, 3.140625
        %v815 = vmul.f32 %v751, 3.140625
        %v816 = vmul.f32 %v752, 3.140625
        %v817 = vmul.f32 %v753, 3.140625
        %v818 = vmul.f32 %v754, 3.140625
        %v819 = vmul.f32 %v755, 3.140625
        %v820 = vmul.f32 %v756, 3.140625
        %v821 = vmul.f32 %v757, 3.140625
        %v822 = vmul.f32 %v758, 3.140625
        %v823 = vmul.f32 %v759, 3.140625
        %v824 = vmul.f32 %v760, 3.140625
        %v825 = vmul.f32 %v761, 3.140625
        %v826 = vmul.f32 %v762, 3.140625
        %v827 = vmul.f32 %v763, 3.140625
        %v828 = vmul.f32 %v764, 3.140625
        %v829 = vmul.f32 %v765, 3.140625
        %v830 = vmul.f32 %v766, 3.140625
        %v831 = vmul.f32 %v767, 3.140625
        %v832 = vmul.f32 %v768, 3.140625
        %v833 = vmul.f32 %v769, 3.140625
        %v834 = vmul.f32 %v770, 3.140625
        %v835 = vmul.f32 %v771, 3.140625
        %v836 = vmul.f32 %v772, 3.140625
        %v837 = vmul.f32 %v773, 3.140625
        %v838 = vmul.f32 %v774, 3.140625
        %v839 = vmul.f32 %v775, 3.140625
        %v840 = vmul.f32 %v776, 3.140625
        %v841 = vmul.f32 %v777, 3.140625
        %v842 = vmul.f32 %v778, 3.140625
        %v843 = vmul.f32 %v779, 3.140625
        %v844 = vmul.f32 %v780, 3.140625
        %v845 = vmul.f32 %v781, 3.140625
        %v846 = vmul.f32 %v782, 3.140625
        %v847 = vmul.f32 %v783, 3.140625
        %v848 = vmul.f32 %v784, 3.140625
        %v849 = vmul.f32 %v785, 3.140625
        %v850 = vmul.f32 %v786, 3.140625
        %v851 = vmul.f32 %v787, 3.140625
        %v852 = vmul.f32 %v788, 3.140625
        %v853 = vmul.f32 %v789, 3.140625
        %v854 = vmul.f32 %v790, 3.140625
        %v855 = vmul.f32 %v791, 3.140625
        %v856 = vmul.f32 %v792, 3.140625
        %v857 = vsub.f32 %v346, %v793
        %v858 = vsub.f32 %v348, %v794
        %v859 = vsub.f32 %v507, %v795
        %v860 = vsub.f32 %v509, %v796
        %v861 = vsub.f32 %v352, %v797
        %v862 = vsub.f32 %v354, %v798
        %v863 = vsub.f32 %v513, %v799
        %v864 = vsub.f32 %v515, %v800
        %v865 = vsub.f32 %v358, %v801
        %v866 = vsub.f32 %v360, %v802
        %v867 = vsub.f32 %v519, %v803
        %v868 = vsub.f32 %v521, %v804
        %v869 = vsub.f32 %v364, %v805
        %v870 = vsub.f32 %v366, %v806
        %v871 = vsub.f32 %v525, %v807
        %v872 = vsub.f32 %v527, %v808
        %v873 = vsub.f32 %v370, %v809
        %v874 = vsub.f32 %v372, %v810
        %v875 = vsub.f32 %v531, %v811
        %v876 = vsub.f32 %v533, %v812
        %v877 = vsub.f32 %v376, %v813
        %v878 = vsub.f32 %v378, %v814
        %v879 = vsub.f32 %v537, %v815
        %v880 = vsub.f32 %v539, %v816
        %v881 = vsub.f32 %v382, %v817
        %v882 = vsub.f32 %v384, %v818
        %v883 = vsub.f32 %v543, %v819
        %v884 = vsub.f32 %v545, %v820
        %v885 = vsub.f32 %v388, %v821
        %v886 = vsub.f32 %v390, %v822
        %v887 = vsub.f32 %v549, %v823
        %v888 = vsub.f32 %v551, %v824
        %v889 = vsub.f32 %v394, %v825
        %v890 = vsub.f32 %v396, %v826
        %v891 = vsub.f32 %v555, %v827
        %v892 = vsub.f32 %v557, %v828
        %v893 = vsub.f32 %v400, %v829
        %v894 = vsub.f32 %v402, %v830
        %v895 = vsub.f32 %v561, %v831
        %v896 = vsub.f32 %v563, %v832
        %v897 = vsub.f32 %v406, %v833
        %v898 = vsub.f32 %v408, %v834
        %v899 = vsub.f32 %v567, %v835
        %v900 = vsub.f32 %v569, %v836
        %v901 = vsub.f32 %v412, %v837
        %v902 = vsub.f32 %v414, %v838
        %v903 = vsub.f32 %v573, %v839
        %v904 = vsub.f32 %v575, %v840
        %v905 = vsub.f32 %v418, %v841
        %v906 = vsub.f32 %v420, %v842
        %v907 = vsub.f32 %v579, %v843
        %v908 = vsub.f32 %v581, %v844
        %v909 = vsub.f32 %v424, %v845
        %v910 = vsub.f32 %v426, %v846
        %v911 = vsub.f32 %v585, %v847
        %v912 = vsub.f32 %v587, %v848
        %v913 = vsub.f32 %v430, %v849
        %v914 = vsub.f32 %v432, %v850
        %v915 = vsub.f32 %v591, %v851
        %v916 = vsub.f32 %v593, %v852
        %v917 = vsub.f32 %v436, %v853
        %v918 = vsub.f32 %v438, %v854
        %v919 = vsub.f32 %v597, %v855
        %v920 = vsub.f32 %v599, %v856
        %v921 = vmul.f32 %v729, 0.0009676536
        %v922 = vmul.f32 %v730, 0.0009676536
        %v923 = vmul.f32 %v731, 0.0009676536
        %v924 = vmul.f32 %v732, 0.0009676536
        %v925 = vmul.f32 %v733, 0.0009676536
        %v926 = vmul.f32 %v734, 0.0009676536
        %v927 = vmul.f32 %v735, 0.0009676536
        %v928 = vmul.f32 %v736, 0.0009676536
        %v929 = vmul.f32 %v737, 0.0009676536
        %v930 = vmul.f32 %v738, 0.0009676536
        %v931 = vmul.f32 %v739, 0.0009676536
        %v932 = vmul.f32 %v740, 0.0009676536
        %v933 = vmul.f32 %v741, 0.0009676536
        %v934 = vmul.f32 %v742, 0.0009676536
        %v935 = vmul.f32 %v743, 0.0009676536
        %v936 = vmul.f32 %v744, 0.0009676536
        %v937 = vmul.f32 %v745, 0.0009676536
        %v938 = vmul.f32 %v746, 0.0009676536
        %v939 = vmul.f32 %v747, 0.0009676536
        %v940 = vmul.f32 %v748, 0.0009676536
        %v941 = vmul.f32 %v749, 0.0009676536
        %v942 = vmul.f32 %v750, 0.0009676536
        %v943 = vmul.f32 %v751, 0.0009676536
        %v944 = vmul.f32 %v752, 0.0009676536
        %v945 = vmul.f32 %v753, 0.0009676536
        %v946 = vmul.f32 %v754, 0.0009676536
        %v947 = vmul.f32 %v755, 0.0009676536
        %v948 = vmul.f32 %v756, 0.0009676536
        %v949 = vmul.f32 %v757, 0.0009676536
        %v950 = vmul.f32 %v758, 0.0009676536
        %v951 = vmul.f32 %v759, 0.0009676536
        %v952 = vmul.f32 %v760, 0.0009676536
        %v953 = vmul.f32 %v761, 0.0009676536
        %v954 = vmul.f32 %v762, 0.0009676536
        %v955 = vmul.f32 %v763, 0.0009676536
        %v956 = vmul.f32 %v764, 0.0009676536
        %v957 = vmul.f32 %v765, 0.0009676536
        %v958 = vmul.f32 %v766, 0.0009676536
        %v959 = vmul.f32 %v767, 0.0009676536
        %v960 = vmul.f32 %v768, 0.0009676536
        %v961 = vmul.f32 %v769, 0.0009676536
        %v962 = vmul.f32 %v770, 0.0009676536
        %v963 = vmul.f32 %v771, 0.0009676536
        %v964 = vmul.f32 %v772, 0.0009676536
        %v965 = vmul.f32 %v773, 0.0009676536
        %v966 = vmul.f32 %v774, 0.0009676536
        %v967 = vmul.f32 %v775, 0.0009676536
        %v968 = vmul.f32 %v776, 0.0009676536
        %v969 = vmul.f32 %v777, 0.0009676536
        %v970 = vmul.f32 %v778, 0.0009676536
        %v971 = vmul.f32 %v779, 0.0009676536
        %v972 = vmul.f32 %v780, 0.0009676536
        %v973 = vmul.f32 %v781, 0.0009676536
        %v974 = vmul.f32 %v782, 0.0009676536
        %v975 = vmul.f32 %v783, 0.0009676536
        %v976 = vmul.f32 %v784, 0.0009676536
        %v977 = vmul.f32 %v785, 0.0009676536
        %v978 = vmul.f32 %v786, 0.0009676536
        %v979 = vmul.f32 %v787, 0.0009676536
        %v980 = vmul.f32 %v788, 0.0009676536
        %v981 = vmul.f32 %v789, 0.0009676536
        %v982 = vmul.f32 %v790, 0.0009676536
        %v983 = vmul.f32 %v791, 0.0009676536
        %v984 = vmul.f32 %v792, 0.0009676536
        %v985 = vsub.f32 %v857, %v921
        %v986 = vsub.f32 %v858, %v922
        %v987 = vsub.f32 %v859, %v923
        %v988 = vsub.f32 %v860, %v924
        %v989 = vsub.f32 %v861, %v925
        %v990 = vsub.f32 %v862, %v926
        %v991 = vsub.f32 %v863, %v927
        %v992 = vsub.f32 %v864, %v928
        %v993 = vsub.f32 %v865, %v929
        %v994 = vsub.f32 %v866, %v930
        %v995 = vsub.f32 %v867, %v931
        %v996 = vsub.f32 %v868, %v932
        %v997 = vsub.f32 %v869, %v933
        %v998 = vsub.f32 %v870, %v934
        %v999 = vsub.f32 %v871, %v935
        %v1000 = vsub.f32 %v872, %v936
        %v1001 = vsub.f32 %v873, %v937
        %v1002 = vsub.f32 %v874, %v938
        %v1003 = vsub.f32 %v875, %v939
        %v1004 = vsub.f32 %v876, %v940
        %v1005 = vsub.f32 %v877, %v941
        %v1006 = vsub.f32 %v878, %v942
        %v1007 = vsub.f32 %v879, %v943
        %v1008 = vsub.f32 %v880, %v944
        %v1009 = vsub.f32 %v881, %v945
        %v1010 = vsub.f32 %v882, %v946
        %v1011 = vsub.f32 %v883, %v947
        %v1012 = vsub.f32 %v884, %v948
        %v1013 = vsub.f32 %v885, %v949
        %v1014 = vsub.f32 %v886, %v950
        %v1015 = vsub.f32 %v887, %v951
        %v1016 = vsub.f32 %v888, %v952
        %v1017 = vsub.f32 %v889, %v953
        %v1018 = vsub.f32 %v890, %v954
        %v1019 = vsub.f32 %v891, %v955
        %v1020 = vsub.f32 %v892, %v956
        %v1021 = vsub.f32 %v893, %v957
        %v1022 = vsub.f32 %v894, %v958
        %v1023 = vsub.f32 %v895, %v959
        %v1024 = vsub.f32 %v896, %v960
        %v1025 = vsub.f32 %v897, %v961
        %v1026 = vsub.f32 %v898, %v962
        %v1027 = vsub.f32 %v899, %v963
        %v1028 = vsub.f32 %v900, %v964
        %v1029 = vsub.f32 %v901, %v965
        %v1030 = vsub.f32 %v902, %v966
        %v1031 = vsub.f32 %v903, %v967
        %v1032 = vsub.f32 %v904, %v968
        %v1033 = vsub.f32 %v905, %v969
        %v1034 = vsub.f32 %v906, %v970
        %v1035 = vsub.f32 %v907, %v971
        %v1036 = vsub.f32 %v908, %v972
        %v1037 = vsub.f32 %v909, %v973
        %v1038 = vsub.f32 %v910, %v974
        %v1039 = vsub.f32 %v911, %v975
        %v1040 = vsub.f32 %v912, %v976
        %v1041 = vsub.f32 %v913, %v977
        %v1042 = vsub.f32 %v914, %v978
        %v1043 = vsub.f32 %v915, %v979
        %v1044 = vsub.f32 %v916, %v980
        %v1045 = vsub.f32 %v917, %v981
        %v1046 = vsub.f32 %v918, %v982
        %v1047 = vsub.f32 %v919, %v983
        %v1048 = vsub.f32 %v920, %v984
        %v1049 = vmul.f32 %v729, 0.5
        %v1050 = vmul.f32 %v730, 0.5
        %v1051 = vmul.f32 %v731, 0.5
        %v1052 = vmul.f32 %v732, 0.5
        %v1053 = vmul.f32 %v733, 0.5
        %v1054 = vmul.f32 %v734, 0.5
        %v1055 = vmul.f32 %v735, 0.5
        %v1056 = vmul.f32 %v736, 0.5
        %v1057 = vmul.f32 %v737, 0.5
        %v1058 = vmul.f32 %v738, 0.5
        %v1059 = vmul.f32 %v739, 0.5
        %v1060 = vmul.f32 %v740, 0.5
        %v1061 = vmul.f32 %v741, 0.5
        %v1062 = vmul.f32 %v742, 0.5
        %v1063 = vmul.f32 %v743, 0.5
        %v1064 = vmul.f32 %v744, 0.5
        %v1065 = vmul.f32 %v745, 0.5
        %v1066 = vmul.f32 %v746, 0.5
        %v1067 = vmul.f32 %v747, 0.5
        %v1068 = vmul.f32 %v748, 0.5
        %v1069 = vmul.f32 %v749, 0.5
        %v1070 = vmul.f32 %v750, 0.5
        %v1071 = vmul.f32 %v751, 0.5
        %v1072 = vmul.f32 %v752, 0.5
        %v1073 = vmul.f32 %v753, 0.5
        %v1074 = vmul.f32 %v754, 0.5
        %v1075 = vmul.f32 %v755, 0.5
        %v1076 = vmul.f32 %v756, 0.5
        %v1077 = vmul.f32 %v757, 0.5
        %v1078 = vmul.f32 %v758, 0.5
        %v1079 = vmul.f32 %v759, 0.5
        %v1080 = vmul.f32 %v760, 0.5
        %v1081 = vmul.f32 %v761, 0.5
        %v1082 = vmul.f32 %v762, 0.5
        %v1083 = vmul.f32 %v763, 0.5
        %v1084 = vmul.f32 %v764, 0.5
        %v1085 = vmul.f32 %v765, 0.5
        %v1086 = vmul.f32 %v766, 0.5
        %v1087 = vmul.f32 %v767, 0.5
        %v1088 = vmul.f32 %v768, 0.5
        %v1089 = vmul.f32 %v769, 0.5
        %v1090 = vmul.f32 %v770, 0.5
        %v1091 = vmul.f32 %v771, 0.5
        %v1092 = vmul.f32 %v772, 0.5
        %v1093 = vmul.f32 %v773, 0.5
        %v1094 = vmul.f32 %v774, 0.5
        %v1095 = vmul.f32 %v775, 0.5
        %v1096 = vmul.f32 %v776, 0.5
        %v1097 = vmul.f32 %v777, 0.5
        %v1098 = vmul.f32 %v778, 0.5
        %v1099 = vmul.f32 %v779, 0.5
        %v1100 = vmul.f32 %v780, 0.5
        %v1101 = vmul.f32 %v781, 0.5
        %v1102 = vmul.f32 %v782, 0.5
        %v1103 = vmul.f32 %v783, 0.5
        %v1104 = vmul.f32 %v784, 0.5
        %v1105 = vmul.f32 %v785, 0.5
        %v1106 = vmul.f32 %v786, 0.5
        %v1107 = vmul.f32 %v787, 0.5
        %v1108 = vmul.f32 %v788, 0.5
        %v1109 = vmul.f32 %v789, 0.5
        %v1110 = vmul.f32 %v790, 0.5
        %v1111 = vmul.f32 %v791, 0.5
        %v1112 = vmul.f32 %v792, 0.5
        %v1113 = vfloor.f32 %v1049
        %v1114 = vfloor.f32 %v1050
        %v1115 = vfloor.f32 %v1051
        %v1116 = vfloor.f32 %v1052
        %v1117 = vfloor.f32 %v1053
        %v1118 = vfloor.f32 %v1054
        %v1119 = vfloor.f32 %v1055
        %v1120 = vfloor.f32 %v1056
        %v1121 = vfloor.f32 %v1057
        %v1122 = vfloor.f32 %v1058
        %v1123 = vfloor.f32 %v1059
        %v1124 = vfloor.f32 %v1060
        %v1125 = vfloor.f32 %v1061
        %v1126 = vfloor.f32 %v1062
        %v1127 = vfloor.f32 %v1063
        %v1128 = vfloor.f32 %v1064
        %v1129 = vfloor.f32 %v1065
        %v1130 = vfloor.f32 %v1066
        %v1131 = vfloor.f32 %v1067
        %v1132 = vfloor.f32 %v1068
        %v1133 = vfloor.f32 %v1069
        %v1134 = vfloor.f32 %v1070
        %v1135 = vfloor.f32 %v1071
        %v1136 = vfloor.f32 %v1072
        %v1137 = vfloor.f32 %v1073
        %v1138 = vfloor.f32 %v1074
        %v1139 = vfloor.f32 %v1075
        %v1140 = vfloor.f32 %v1076
        %v1141 = vfloor.f32 %v1077
        %v1142 = vfloor.f32 %v1078
        %v1143 = vfloor.f32 %v1079
        %v1144 = vfloor.f32 %v1080
        %v1145 = vfloor.f32 %v1081
        %v1146 = vfloor.f32 %v1082
        %v1147 = vfloor.f32 %v1083
        %v1148 = vfloor.f32 %v1084
        %v1149 = vfloor.f32 %v1085
        %v1150 = vfloor.f32 %v1086
        %v1151 = vfloor.f32 %v1087
        %v1152 = vfloor.f32 %v1088
        %v1153 = vfloor.f32 %v1089
        %v1154 = vfloor.f32 %v1090
        %v1155 = vfloor.f32 %v1091
        %v1156 = vfloor.f32 %v1092
        %v1157 = vfloor.f32 %v1093
        %v1158 = vfloor.f32 %v1094
        %v1159 = vfloor.f32 %v1095
        %v1160 = vfloor.f32 %v1096
        %v1161 = vfloor.f32 %v1097
        %v1162 = vfloor.f32 %v1098
        %v1163 = vfloor.f32 %v1099
        %v1164 = vfloor.f32 %v1100
        %v1165 = vfloor.f32 %v1101
        %v1166 = vfloor.f32 %v1102
        %v1167 = vfloor.f32 %v1103
        %v1168 = vfloor.f32 %v1104
        %v1169 = vfloor.f32 %v1105
        %v1170 = vfloor.f32 %v1106
        %v1171 = vfloor.f32 %v1107
        %v1172 = vfloor.f32 %v1108
        %v1173 = vfloor.f32 %v1109
        %v1174 = vfloor.f32 %v1110
        %v1175 = vfloor.f32 %v1111
        %v1176 = vfloor.f32 %v1112
        %v1177 = vmul.f32 %v1113, 2.0
        %v1178 = vmul.f32 %v1114, 2.0
        %v1179 = vmul.f32 %v1115, 2.0
        %v1180 = vmul.f32 %v1116, 2.0
        %v1181 = vmul.f32 %v1117, 2.0
        %v1182 = vmul.f32 %v1118, 2.0
        %v1183 = vmul.f32 %v1119, 2.0
        %v1184 = vmul.f32 %v1120, 2.0
        %v1185 = vmul.f32 %v1121, 2.0
        %v1186 = vmul.f32 %v1122, 2.0
        %v1187 = vmul.f32 %v1123, 2.0
        %v1188 = vmul.f32 %v1124, 2.0
        %v1189 = vmul.f32 %v1125, 2.0
        %v1190 = vmul.f32 %v1126, 2.0
        %v1191 = vmul.f32 %v1127, 2.0
        %v1192 = vmul.f32 %v1128, 2.0
        %v1193 = vmul.f32 %v1129, 2.0
        %v1194 = vmul.f32 %v1130, 2.0
        %v1195 = vmul.f32 %v1131, 2.0
        %v1196 = vmul.f32 %v1132, 2.0
        %v1197 = vmul.f32 %v1133, 2.0
        %v1198 = vmul.f32 %v1134, 2.0
        %v1199 = vmul.f32 %v1135, 2.0
        %v1200 = vmul.f32 %v1136, 2.0
        %v1201 = vmul.f32 %v1137, 2.0
        %v1202 = vmul.f32 %v1138, 2.0
        %v1203 = vmul.f32 %v1139, 2.0
        %v1204 = vmul.f32 %v1140, 2.0
        %v1205 = vmul.f32 %v1141, 2.0
        %v1206 = vmul.f32 %v1142, 2.0
        %v1207 = vmul.f32 %v1143, 2.0
        %v1208 = vmul.f32 %v1144, 2.0
        %v1209 = vmul.f32 %v1145, 2.0
        %v1210 = vmul.f32 %v1146, 2.0
        %v1211 = vmul.f32 %v1147, 2.0
        %v1212 = vmul.f32 %v1148, 2.0
        %v1213 = vmul.f32 %v1149, 2.0
        %v1214 = vmul.f32 %v1150, 2.0
        %v1215 = vmul.f32 %v1151, 2.0
        %v1216 = vmul.f32 %v1152, 2.0
        %v1217 = vmul.f32 %v1153, 2.0
        %v1218 = vmul.f32 %v1154, 2.0
        %v1219 = vmul.f32 %v1155, 2.0
        %v1220 = vmul.f32 %v1156, 2.0
        %v1221 = vmul.f32 %v1157, 2.0
        %v1222 = vmul.f32 %v1158, 2.0
        %v1223 = vmul.f32 %v1159, 2.0
        %v1224 = vmul.f32 %v1160, 2.0
        %v1225 = vmul.f32 %v1161, 2.0
        %v1226 = vmul.f32 %v1162, 2.0
        %v1227 = vmul.f32 %v1163, 2.0
        %v1228 = vmul.f32 %v1164, 2.0
        %v1229 = vmul.f32 %v1165, 2.0
        %v1230 = vmul.f32 %v1166, 2.0
        %v1231 = vmul.f32 %v1167, 2.0
        %v1232 = vmul.f32 %v1168, 2.0
        %v1233 = vmul.f32 %v1169, 2.0
        %v1234 = vmul.f32 %v1170, 2.0
        %v1235 = vmul.f32 %v1171, 2.0
        %v1236 = vmul.f32 %v1172, 2.0
        %v1237 = vmul.f32 %v1173, 2.0
        %v1238 = vmul.f32 %v1174, 2.0
        %v1239 = vmul.f32 %v1175, 2.0
        %v1240 = vmul.f32 %v1176, 2.0
        %v1241 = vsub.f32 %v729, %v1177
        %v1242 = vsub.f32 %v730, %v1178
        %v1243 = vsub.f32 %v731, %v1179
        %v1244 = vsub.f32 %v732, %v1180
        %v1245 = vsub.f32 %v733, %v1181
        %v1246 = vsub.f32 %v734, %v1182
        %v1247 = vsub.f32 %v735, %v1183
        %v1248 = vsub.f32 %v736, %v1184
        %v1249 = vsub.f32 %v737, %v1185
        %v1250 = vsub.f32 %v738, %v1186
        %v1251 = vsub.f32 %v739, %v1187
        %v1252 = vsub.f32 %v740, %v1188
        %v1253 = vsub.f32 %v741, %v1189
        %v1254 = vsub.f32 %v742, %v1190
        %v1255 = vsub.f32 %v743, %v1191
        %v1256 = vsub.f32 %v744, %v1192
        %v1257 = vsub.f32 %v745, %v1193
        %v1258 = vsub.f32 %v746, %v1194
        %v1259 = vsub.f32 %v747, %v1195
        %v1260 = vsub.f32 %v748, %v1196
        %v1261 = vsub.f32 %v749, %v1197
        %v1262 = vsub.f32 %v750, %v1198
        %v1263 = vsub.f32 %v751, %v1199
        %v1264 = vsub.f32 %v752, %v1200
        %v1265 = vsub.f32 %v753, %v1201
        %v1266 = vsub.f32 %v754, %v1202
        %v1267 = vsub.f32 %v755, %v1203
        %v1268 = vsub.f32 %v756, %v1204
        %v1269 = vsub.f32 %v757, %v1205
        %v1270 = vsub.f32 %v758, %v1206
        %v1271 = vsub.f32 %v759, %v1207
        %v1272 = vsub.f32 %v760, %v1208
        %v1273 = vsub.f32 %v761, %v1209
        %v1274 = vsub.f32 %v762, %v1210
        %v1275 = vsub.f32 %v763, %v1211
        %v1276 = vsub.f32 %v764, %v1212
        %v1277 = vsub.f32 %v765, %v1213
        %v1278 = vsub.f32 %v766, %v1214
        %v1279 = vsub.f32 %v767, %v1215
        %v1280 = vsub.f32 %v768, %v1216
        %v1281 = vsub.f32 %v769, %v1217
        %v1282 = vsub.f32 %v770, %v1218
        %v1283 = vsub.f32 %v771, %v1219
        %v1284 = vsub.f32 %v772, %v1220
        %v1285 = vsub.f32 %v773, %v1221
        %v1286 = vsub.f32 %v774, %v1222
        %v1287 = vsub.f32 %v775, %v1223
        %v1288 = vsub.f32 %v776, %v1224
        %v1289 = vsub.f32 %v777, %v1225
        %v1290 = vsub.f32 %v778, %v1226
        %v1291 = vsub.f32 %v779, %v1227
        %v1292 = vsub.f32 %v780, %v1228
        %v1293 = vsub.f32 %v781, %v1229
        %v1294 = vsub.f32 %v782, %v1230
        %v1295 = vsub.f32 %v783, %v1231
        %v1296 = vsub.f32 %v784, %v1232
        %v1297 = vsub.f32 %v785, %v1233
        %v1298 = vsub.f32 %v786, %v1234
        %v1299 = vsub.f32 %v787, %v1235
        %v1300 = vsub.f32 %v788, %v1236
        %v1301 = vsub.f32 %v789, %v1237
        %v1302 = vsub.f32 %v790, %v1238
        %v1303 = vsub.f32 %v791, %v1239
        %v1304 = vsub.f32 %v792, %v1240
        %v1305 = vmul.f32 %v1241, 2.0
        %v1306 = vmul.f32 %v1242, 2.0
        %v1307 = vmul.f32 %v1243, 2.0
        %v1308 = vmul.f32 %v1244, 2.0
        %v1309 = vmul.f32 %v1245, 2.0
        %v1310 = vmul.f32 %v1246, 2.0
        %v1311 = vmul.f32 %v1247, 2.0
        %v1312 = vmul.f32 %v1248, 2.0
        %v1313 = vmul.f32 %v1249, 2.0
        %v1314 = vmul.f32 %v1250, 2.0
        %v1315 = vmul.f32 %v1251, 2.0
        %v1316 = vmul.f32 %v1252, 2.0
        %v1317 = vmul.f32 %v1253, 2.0
        %v1318 = vmul.f32 %v1254, 2.0
        %v1319 = vmul.f32 %v1255, 2.0
        %v1320 = vmul.f32 %v1256, 2.0
        %v1321 = vmul.f32 %v1257, 2.0
        %v1322 = vmul.f32 %v1258, 2.0
        %v1323 = vmul.f32 %v1259, 2.0
        %v1324 = vmul.f32 %v1260, 2.0
        %v1325 = vmul.f32 %v1261, 2.0
        %v1326 = vmul.f32 %v1262, 2.0
        %v1327 = vmul.f32 %v1263, 2.0
        %v1328 = vmul.f32 %v1264, 2.0
        %v1329 = vmul.f32 %v1265, 2.0
        %v1330 = vmul.f32 %v1266, 2.0
        %v1331 = vmul.f32 %v1267, 2.0
        %v1332 = vmul.f32 %v1268, 2.0
        %v1333 = vmul.f32 %v1269, 2.0
        %v1334 = vmul.f32 %v1270, 2.0
        %v1335 = vmul.f32 %v1271, 2.0
        %v1336 = vmul.f32 %v1272, 2.0
        %v1337 = vmul.f32 %v1273, 2.0
        %v1338 = vmul.f32 %v1274, 2.0
        %v1339 = vmul.f32 %v1275, 2.0
        %v1340 = vmul.f32 %v1276, 2.0
        %v1341 = vmul.f32 %v1277, 2.0
        %v1342 = vmul.f32 %v1278, 2.0
        %v1343 = vmul.f32 %v1279, 2.0
        %v1344 = vmul.f32 %v1280, 2.0
        %v1345 = vmul.f32 %v1281, 2.0
        %v1346 = vmul.f32 %v1282, 2.0
        %v1347 = vmul.f32 %v1283, 2.0
        %v1348 = vmul.f32 %v1284, 2.0
        %v1349 = vmul.f32 %v1285, 2.0
        %v1350 = vmul.f32 %v1286, 2.0
        %v1351 = vmul.f32 %v1287, 2.0
        %v1352 = vmul.f32 %v1288, 2.0
        %v1353 = vmul.f32 %v1289, 2.0
        %v1354 = vmul.f32 %v1290, 2.0
        %v1355 = vmul.f32 %v1291, 2.0
        %v1356 = vmul.f32 %v1292, 2.0
        %v1357 = vmul.f32 %v1293, 2.0
        %v1358 = vmul.f32 %v1294, 2.0
        %v1359 = vmul.f32 %v1295, 2.0
        %v1360 = vmul.f32 %v1296, 2.0
        %v1361 = vmul.f32 %v1297, 2.0
        %v1362 = vmul.f32 %v1298, 2.0
        %v1363 = vmul.f32 %v1299, 2.0
        %v1364 = vmul.f32 %v1300, 2.0
        %v1365 = vmul.f32 %v1301, 2.0
        %v1366 = vmul.f32 %v1302, 2.0
        %v1367 = vmul.f32 %v1303, 2.0
        %v1368 = vmul.f32 %v1304, 2.0
        %v1369 = vsub.f32 1.0, %v1305
        %v1370 = vsub.f32 1.0, %v1306
        %v1371 = vsub.f32 1.0, %v1307
        %v1372 = vsub.f32 1.0, %v1308
        %v1373 = vsub.f32 1.0, %v1309
        %v1374 = vsub.f32 1.0, %v1310
        %v1375 = vsub.f32 1.0, %v1311
        %v1376 = vsub.f32 1.0, %v1312
        %v1377 = vsub.f32 1.0, %v1313
        %v1378 = vsub.f32 1.0, %v1314
        %v1379 = vsub.f32 1.0, %v1315
        %v1380 = vsub.f32 1.0, %v1316
        %v1381 = vsub.f32 1.0, %v1317
        %v1382 = vsub.f32 1.0, %v1318
        %v1383 = vsub.f32 1.0, %v1319
        %v1384 = vsub.f32 1.0, %v1320
        %v1385 = vsub.f32 1.0, %v1321
        %v1386 = vsub.f32 1.0, %v1322
        %v1387 = vsub.f32 1.0, %v1323
        %v1388 = vsub.f32 1.0, %v1324
        %v1389 = vsub.f32 1.0, %v1325
        %v1390 = vsub.f32 1.0, %v1326
        %v1391 = vsub.f32 1.0, %v1327
        %v1392 = vsub.f32 1.0, %v1328
        %v1393 = vsub.f32 1.0, %v1329
        %v1394 = vsub.f32 1.0, %v1330
        %v1395 = vsub.f32 1.0, %v1331
        %v1396 = vsub.f32 1.0, %v1332
        %v1397 = vsub.f32 1.0, %v1333
        %v1398 = vsub.f32 1.0, %v1334
        %v1399 = vsub.f32 1.0, %v1335
        %v1400 = vsub.f32 1.0, %v1336
        %v1401 = vsub.f32 1.0, %v1337
        %v1402 = vsub.f32 1.0, %v1338
        %v1403 = vsub.f32 1.0, %v1339
        %v1404 = vsub.f32 1.0, %v1340
        %v1405 = vsub.f32 1.0, %v1341
        %v1406 = vsub.f32 1.0, %v1342
        %v1407 = vsub.f32 1.0, %v1343
        %v1408 = vsub.f32 1.0, %v1344
        %v1409 = vsub.f32 1.0, %v1345
        %v1410 = vsub.f32 1.0, %v1346
        %v1411 = vsub.f32 1.0, %v1347
        %v1412 = vsub.f32 1.0, %v1348
        %v1413 = vsub.f32 1.0, %v1349
        %v1414 = vsub.f32 1.0, %v1350
        %v1415 = vsub.f32 1.0, %v1351
        %v1416 = vsub.f32 1.0, %v1352
        %v1417 = vsub.f32 1.0, %v1353
        %v1418 = vsub.f32 1.0, %v1354
        %v1419 = vsub.f32 1.0, %v1355
        %v1420 = vsub.f32 1.0, %v1356
        %v1421 = vsub.f32 1.0, %v1357
        %v1422 = vsub.f32 1.0, %v1358
        %v1423 = vsub.f32 1.0, %v1359
        %v1424 = vsub.f32 1.0, %v1360
        %v1425 = vsub.f32 1.0, %v1361
        %v1426 = vsub.f32 1.0, %v1362
        %v1427 = vsub.f32 1.0, %v1363
        %v1428 = vsub.f32 1.0, %v1364
        %v1429 = vsub.f32 1.0, %v1365
        %v1430 = vsub.f32 1.0, %v1366
        %v1431 = vsub.f32 1.0, %v1367
        %v1432 = vsub.f32 1.0, %v1368
        %v1433 = vmul.f32 %v985, %v1369
        %v1434 = vmul.f32 %v986, %v1370
        %v1435 = vmul.f32 %v987, %v1371
        %v1436 = vmul.f32 %v988, %v1372
        %v1437 = vmul.f32 %v989, %v1373
        %v1438 = vmul.f32 %v990, %v1374
        %v1439 = vmul.f32 %v991, %v1375
        %v1440 = vmul.f32 %v992, %v1376
        %v1441 = vmul.f32 %v993, %v1377
        %v1442 = vmul.f32 %v994, %v1378
        %v1443 = vmul.f32 %v995, %v1379
        %v1444 = vmul.f32 %v996, %v1380
        %v1445 = vmul.f32 %v997, %v1381
        %v1446 = vmul.f32 %v998, %v1382
        %v1447 = vmul.f32 %v999, %v1383
        %v1448 = vmul.f32 %v1000, %v1384
        %v1449 = vmul.f32 %v1001, %v1385
        %v1450 = vmul.f32 %v1002, %v1386
        %v1451 = vmul.f32 %v1003, %v1387
        %v1452 = vmul.f32 %v1004, %v1388
        %v1453 = vmul.f32 %v1005, %v1389
        %v1454 = vmul.f32 %v1006, %v1390
        %v1455 = vmul.f32 %v1007, %v1391
        %v1456 = vmul.f32 %v1008, %v1392
        %v1457 = vmul.f32 %v1009, %v1393
        %v1458 = vmul.f32 %v1010, %v1394
        %v1459 = vmul.f32 %v1011, %v1395
        %v1460 = vmul.f32 %v1012, %v1396
        %v1461 = vmul.f32 %v1013, %v1397
        %v1462 = vmul.f32 %v1014, %v1398
        %v1463 = vmul.f32 %v1015, %v1399
        %v1464 = vmul.f32 %v1016, %v1400
        %v1465 = vmul.f32 %v1017, %v1401
        %v1466 = vmul.f32 %v1018, %v1402
        %v1467 = vmul.f32 %v1019, %v1403
        %v1468 = vmul.f32 %v1020, %v1404
        %v1469 = vmul.f32 %v1021, %v1405
        %v1470 = vmul.f32 %v1022, %v1406
        %v1471 = vmul.f32 %v1023, %v1407
        %v1472 = vmul.f32 %v1024, %v1408
        %v1473 = vmul.f32 %v1025, %v1409
        %v1474 = vmul.f32 %v1026, %v1410
        %v1475 = vmul.f32 %v1027, %v1411
        %v1476 = vmul.f32 %v1028, %v1412
        %v1477 = vmul.f32 %v1029, %v1413
        %v1478 = vmul.f32 %v1030, %v1414
        %v1479 = vmul.f32 %v1031, %v1415
        %v1480 = vmul.f32 %v1032, %v1416
        %v1481 = vmul.f32 %v1033, %v1417
        %v1482 = vmul.f32 %v1034, %v1418
        %v1483 = vmul.f32 %v1035, %v1419
        %v1484 = vmul.f32 %v1036, %v1420
        %v1485 = vmul.f32 %v1037, %v1421
        %v1486 = vmul.f32 %v1038, %v1422
        %v1487 = vmul.f32 %v1039, %v1423
        %v1488 = vmul.f32 %v1040, %v1424
        %v1489 = vmul.f32 %v1041, %v1425
        %v1490 = vmul.f32 %v1042, %v1426
        %v1491 = vmul.f32 %v1043, %v1427
        %v1492 = vmul.f32 %v1044, %v1428
        %v1493 = vmul.f32 %v1045, %v1429
        %v1494 = vmul.f32 %v1046, %v1430
        %v1495 = vmul.f32 %v1047, %v1431
        %v1496 = vmul.f32 %v1048, %v1432
        %v1497 = vmul.f32 %v1433, %v1433
        %v1498 = vmul.f32 %v1434, %v1434
        %v1499 = vmul.f32 %v1435, %v1435
        %v1500 = vmul.f32 %v1436, %v1436
        %v1501 = vmul.f32 %v1437, %v1437
        %v1502 = vmul.f32 %v1438, %v1438
        %v1503 = vmul.f32 %v1439, %v1439
        %v1504 = vmul.f32 %v1440, %v1440
        %v1505 = vmul.f32 %v1441, %v1441
        %v1506 = vmul.f32 %v1442, %v1442
        %v1507 = vmul.f32 %v1443, %v1443
        %v1508 = vmul.f32 %v1444, %v1444
        %v1509 = vmul.f32 %v1445, %v1445
        %v1510 = vmul.f32 %v1446, %v1446
        %v1511 = vmul.f32 %v1447, %v1447
        %v1512 = vmul.f32 %v1448, %v1448
        %v1513 = vmul.f32 %v1449, %v1449
        %v1514 = vmul.f32 %v1450, %v1450
        %v1515 = vmul.f32 %v1451, %v1451
        %v1516 = vmul.f32 %v1452, %v1452
        %v1517 = vmul.f32 %v1453, %v1453
        %v1518 = vmul.f32 %v1454, %v1454
        %v1519 = vmul.f32 %v1455, %v1455
        %v1520 = vmul.f32 %v1456, %v1456
        %v1521 = vmul.f32 %v1457, %v1457
        %v1522 = vmul.f32 %v1458, %v1458
        %v1523 = vmul.f32 %v1459, %v1459
        %v1524 = vmul.f32 %v1460, %v1460
        %v1525 = vmul.f32 %v1461, %v1461
        %v1526 = vmul.f32 %v1462, %v1462
        %v1527 = vmul.f32 %v1463, %v1463
        %v1528 = vmul.f32 %v1464, %v1464
        %v1529 = vmul.f32 %v1465, %v1465
        %v1530 = vmul.f32 %v1466, %v1466
        %v1531 = vmul.f32 %v1467, %v1467
        %v1532 = vmul.f32 %v1468, %v1468
        %v1533 = vmul.f32 %v1469, %v1469
        %v1534 = vmul.f32 %v1470, %v1470
        %v1535 = vmul.f32 %v1471, %v1471
        %v1536 = vmul.f32 %v1472, %v1472
        %v1537 = vmul.f32 %v1473, %v1473
        %v1538 = vmul.f32 %v1474, %v1474
        %v1539 = vmul.f32 %v1475, %v1475
        %v1540 = vmul.f32 %v1476, %v1476
        %v1541 = vmul.f32 %v1477, %v1477
        %v1542 = vmul.f32 %v1478, %v1478
        %v1543 = vmul.f32 %v1479, %v1479
        %v1544 = vmul.f32 %v1480, %v1480
        %v1545 = vmul.f32 %v1481, %v1481
        %v1546 = vmul.f32 %v1482, %v1482
        %v1547 = vmul.f32 %v1483, %v1483
        %v1548 = vmul.f32 %v1484, %v1484
        %v1549 = vmul.f32 %v1485, %v1485
        %v1550 = vmul.f32 %v1486, %v1486
        %v1551 = vmul.f32 %v1487, %v1487
        %v1552 = vmul.f32 %v1488, %v1488
        %v1553 = vmul.f32 %v1489, %v1489
        %v1554 = vmul.f32 %v1490, %v1490
        %v1555 = vmul.f32 %v1491, %v1491
        %v1556 = vmul.f32 %v1492, %v1492
        %v1557 = vmul.f32 %v1493, %v1493
        %v1558 = vmul.f32 %v1494, %v1494
        %v1559 = vmul.f32 %v1495, %v1495
        %v1560 = vmul.f32 %v1496, %v1496
        %v1561 = vmul.f32 %v1497, 2.7557319e-06
        %v1562 = vmul.f32 %v1498, 2.7557319e-06
        %v1563 = vmul.f32 %v1499, 2.7557319e-06
        %v1564 = vmul.f32 %v1500, 2.7557319e-06
        %v1565 = vmul.f32 %v1501, 2.7557319e-06
        %v1566 = vmul.f32 %v1502, 2.7557319e-06
        %v1567 = vmul.f32 %v1503, 2.7557319e-06
        %v1568 = vmul.f32 %v1504, 2.7557319e-06
        %v1569 = vmul.f32 %v1505, 2.7557319e-06
        %v1570 = vmul.f32 %v1506, 2.7557319e-06
        %v1571 = vmul.f32 %v1507, 2.7557319e-06
        %v1572 = vmul.f32 %v1508, 2.7557319e-06
        %v1573 = vmul.f32 %v1509, 2.7557319e-06
        %v1574 = vmul.f32 %v1510, 2.7557319e-06
        %v1575 = vmul.f32 %v1511, 2.7557319e-06
        %v1576 = vmul.f32 %v1512, 2.7557319e-06
        %v1577 = vmul.f32 %v1513, 2.7557319e-06
        %v1578 = vmul.f32 %v1514, 2.7557319e-06
        %v1579 = vmul.f32 %v1515, 2.7557319e-06
        %v1580 = vmul.f32 %v1516, 2.7557319e-06
        %v1581 = vmul.f32 %v1517, 2.7557319e-06
        %v1582 = vmul.f32 %v1518, 2.7557319e-06
        %v1583 = vmul.f32 %v1519, 2.7557319e-06
        %v1584 = vmul.f32 %v1520, 2.7557319e-06
        %v1585 = vmul.f32 %v1521, 2.7557319e-06
        %v1586 = vmul.f32 %v1522, 2.7557319e-06
        %v1587 = vmul.f32 %v1523, 2.7557319e-06
        %v1588 = vmul.f32 %v1524, 2.7557319e-06
        %v1589 = vmul.f32 %v1525, 2.7557319e-06
        %v1590 = vmul.f32 %v1526, 2.7557319e-06
        %v1591 = vmul.f32 %v1527, 2.7557319e-06
        %v1592 = vmul.f32 %v1528, 2.7557319e-06
        %v1593 = vmul.f32 %v1529, 2.7557319e-06
        %v1594 = vmul.f32 %v1530, 2.7557319e-06
        %v1595 = vmul.f32 %v1531, 2.7557319e-06
        %v1596 = vmul.f32 %v1532, 2.7557319e-06
        %v1597 = vmul.f32 %v1533, 2.7557319e-06
        %v1598 = vmul.f32 %v1534, 2.7557319e-06
        %v1599 = vmul.f32 %v1535, 2.7557319e-06
        %v1600 = vmul.f32 %v1536, 2.7557319e-06
        %v1601 = vmul.f32 %v1537, 2.7557319e-06
        %v1602 = vmul.f32 %v1538, 2.7557319e-06
        %v1603 = vmul.f32 %v1539, 2.7557319e-06
        %v1604 = vmul.f32 %v1540, 2.7557319e-06
        %v1605 = vmul.f32 %v1541, 2.7557319e-06
        %v1606 = vmul.f32 %v1542, 2.7557319e-06
        %v1607 = vmul.f32 %v1543, 2.7557319e-06
        %v1608 = vmul.f32 %v1544, 2.7557319e-06
        %v1609 = vmul.f32 %v1545, 2.7557319e-06
        %v1610 = vmul.f32 %v1546, 2.7557319e-06
        %v1611 = vmul.f32 %v1547, 2.7557319e-06
        %v1612 = vmul.f32 %v1548, 2.7557319e-06
        %v1613 = vmul.f32 %v1549, 2.7557319e-06
        %v1614 = vmul.f32 %v1550, 2.7557319e-06
        %v1615 = vmul.f32 %v1551, 2.7557319e-06
        %v1616 = vmul.f32 %v1552, 2.7557319e-06
        %v1617 = vmul.f32 %v1553, 2.7557319e-06
        %v1618 = vmul.f32 %v1554, 2.7557319e-06
        %v1619 = vmul.f32 %v1555, 2.7557319e-06
        %v1620 = vmul.f32 %v1556, 2.7557319e-06
        %v1621 = vmul.f32 %v1557, 2.7557319e-06
        %v1622 = vmul.f32 %v1558, 2.7557319e-06
        %v1623 = vmul.f32 %v1559, 2.7557319e-06
        %v1624 = vmul.f32 %v1560, 2.7557319e-06
        %v1625 = vadd.f32 %v1561, -0.0001984127
        %v1626 = vadd.f32 %v1562, -0.0001984127
        %v1627 = vadd.f32 %v1563, -0.0001984127
        %v1628 = vadd.f32 %v1564, -0.0001984127
        %v1629 = vadd.f32 %v1565, -0.0001984127
        %v1630 = vadd.f32 %v1566, -0.0001984127
        %v1631 = vadd.f32 %v1567, -0.0001984127
        %v1632 = vadd.f32 %v1568, -0.0001984127
        %v1633 = vadd.f32 %v1569, -0.0001984127
        %v1634 = vadd.f32 %v1570, -0.0001984127
        %v1635 = vadd.f32 %v1571, -0.0001984127
        %v1636 = vadd.f32 %v1572, -0.0001984127
        %v1637 = vadd.f32 %v1573, -0.0001984127
        %v1638 = vadd.f32 %v1574, -0.0001984127
        %v1639 = vadd.f32 %v1575, -0.0001984127
        %v1640 = vadd.f32 %v1576, -0.0001984127
        %v1641 = vadd.f32 %v1577, -0.0001984127
        %v1642 = vadd.f32 %v1578, -0.0001984127
        %v1643 = vadd.f32 %v1579, -0.0001984127
        %v1644 = vadd.f32 %v1580, -0.0001984127
        %v1645 = vadd.f32 %v1581, -0.0001984127
        %v1646 = vadd.f32 %v1582, -0.0001984127
        %v1647 = vadd.f32 %v1583, -0.0001984127
        %v1648 = vadd.f32 %v1584, -0.0001984127
        %v1649 = vadd.f32 %v1585, -0.0001984127
        %v1650 = vadd.f32 %v1586, -0.0001984127
        %v1651 = vadd.f32 %v1587, -0.0001984127
        %v1652 = vadd.f32 %v1588, -0.0001984127
        %v1653 = vadd.f32 %v1589, -0.0001984127
        %v1654 = vadd.f32 %v1590, -0.0001984127
        %v1655 = vadd.f32 %v1591, -0.0001984127
        %v1656 = vadd.f32 %v1592, -0.0001984127
        %v1657 = vadd.f32 %v1593, -0.0001984127
        %v1658 = vadd.f32 %v1594, -0.0001984127
        %v1659 = vadd.f32 %v1595, -0.0001984127
        %v1660 = vadd.f32 %v1596, -0.0001984127
        %v1661 = vadd.f32 %v1597, -0.0001984127
        %v1662 = vadd.f32 %v1598, -0.0001984127
        %v1663 = vadd.f32 %v1599, -0.0001984127
        %v1664 = vadd.f32 %v1600, -0.0001984127
        %v1665 = vadd.f32 %v1601, -0.0001984127
        %v1666 = vadd.f32 %v1602, -0.0001984127
        %v1667 = vadd.f32 %v1603, -0.0001984127
        %v1668 = vadd.f32 %v1604, -0.0001984127
        %v1669 = vadd.f32 %v1605, -0.0001984127
        %v1670 = vadd.f32 %v1606, -0.0001984127
        %v1671 = vadd.f32 %v1607, -0.0001984127
        %v1672 = vadd.f32 %v1608, -0.0001984127
        %v1673 = vadd.f32 %v1609, -0.0001984127
        %v1674 = vadd.f32 %v1610, -0.0001984127
        %v1675 = vadd.f32 %v1611, -0.0001984127
        %v1676 = vadd.f32 %v1612, -0.0001984127
        %v1677 = vadd.f32 %v1613, -0.0001984127
        %v1678 = vadd.f32 %v1614, -0.0001984127
        %v1679 = vadd.f32 %v1615, -0.0001984127
        %v1680 = vadd.f32 %v1616, -0.0001984127
        %v1681 = vadd.f32 %v1617, -0.0001984127
        %v1682 = vadd.f32 %v1618, -0.0001984127
        %v1683 = vadd.f32 %v1619, -0.0001984127
        %v1684 = vadd.f32 %v1620, -0.0001984127
        %v1685 = vadd.f32 %v1621, -0.0001984127
        %v1686 = vadd.f32 %v1622, -0.0001984127
        %v1687 = vadd.f32 %v1623, -0.0001984127
        %v1688 = vadd.f32 %v1624, -0.0001984127
        %v1689 = vmul.f32 %v1625, %v1497
        %v1690 = vmul.f32 %v1626, %v1498
        %v1691 = vmul.f32 %v1627, %v1499
        %v1692 = vmul.f32 %v1628, %v1500
        %v1693 = vmul.f32 %v1629, %v1501
        %v1694 = vmul.f32 %v1630, %v1502
        %v1695 = vmul.f32 %v1631, %v1503
        %v1696 = vmul.f32 %v1632, %v1504
        %v1697 = vmul.f32 %v1633, %v1505
        %v1698 = vmul.f32 %v1634, %v1506
        %v1699 = vmul.f32 %v1635, %v1507
        %v1700 = vmul.f32 %v1636, %v1508
        %v1701 = vmul.f32 %v1637, %v1509
        %v1702 = vmul.f32 %v1638, %v1510
        %v1703 = vmul.f32 %v1639, %v1511
        %v1704 = vmul.f32 %v1640, %v1512
        %v1705 = vmul.f32 %v1641, %v1513
        %v1706 = vmul.f32 %v1642, %v1514
        %v1707 = vmul.f32 %v1643, %v1515
        %v1708 = vmul.f32 %v1644, %v1516
        %v1709 = vmul.f32 %v1645, %v1517
        %v1710 = vmul.f32 %v1646, %v1518
        %v1711 = vmul.f32 %v1647, %v1519
        %v1712 = vmul.f32 %v1648, %v1520
        %v1713 = vmul.f32 %v1649, %v1521
        %v1714 = vmul.f32 %v1650, %v1522
        %v1715 = vmul.f32 %v1651, %v1523
        %v1716 = vmul.f32 %v1652, %v1524
        %v1717 = vmul.f32 %v1653, %v1525
        %v1718 = vmul.f32 %v1654, %v1526
        %v1719 = vmul.f32 %v1655, %v1527
        %v1720 = vmul.f32 %v1656, %v1528
        %v1721 = vmul.f32 %v1657, %v1529
        %v1722 = vmul.f32 %v1658, %v1530
        %v1723 = vmul.f32 %v1659, %v1531
        %v1724 = vmul.f32 %v1660, %v1532
        %v1725 = vmul.f32 %v1661, %v1533
        %v1726 = vmul.f32 %v1662, %v1534
        %v1727 = vmul.f32 %v1663, %v1535
        %v1728 = vmul.f32 %v1664, %v1536
        %v1729 = vmul.f32 %v1665, %v1537
        %v1730 = vmul.f32 %v1666, %v1538
        %v1731 = vmul.f32 %v1667, %v1539
        %v1732 = vmul.f32 %v1668, %v1540
        %v1733 = vmul.f32 %v1669, %v1541
        %v1734 = vmul.f32 %v1670, %v1542
        %v1735 = vmul.f32 %v1671, %v1543
        %v1736 = vmul.f32 %v1672, %v1544
        %v1737 = vmul.f32 %v1673, %v1545
        %v1738 = vmul.f32 %v1674, %v1546
        %v1739 = vmul.f32 %v1675, %v1547
        %v1740 = vmul.f32 %v1676, %v1548
        %v1741 = vmul.f32 %v1677, %v1549
        %v1742 = vmul.f32 %v1678, %v1550
        %v1743 = vmul.f32 %v1679, %v1551
        %v1744 = vmul.f32 %v1680, %v1552
        %v1745 = vmul.f32 %v1681, %v1553
        %v1746 = vmul.f32 %v1682, %v1554
        %v1747 = vmul.f32 %v1683, %v1555
        %v1748 = vmul.f32 %v1684, %v1556
        %v1749 = vmul.f32 %v1685, %v1557
        %v1750 = vmul.f32 %v1686, %v1558
        %v1751 = vmul.f32 %v1687, %v1559
        %v1752 = vmul.f32 %v1688, %v1560
        %v1753 = vadd.f32 %v1689, 0.008333334
        %v1754 = vadd.f32 %v1690, 0.008333334
        %v1755 = vadd.f32 %v1691, 0.008333334
        %v1756 = vadd.f32 %v1692, 0.008333334
        %v1757 = vadd.f32 %v1693, 0.008333334
        %v1758 = vadd.f32 %v1694, 0.008333334
        %v1759 = vadd.f32 %v1695, 0.008333334
        %v1760 = vadd.f32 %v1696, 0.008333334
        %v1761 = vadd.f32 %v1697, 0.008333334
        %v1762 = vadd.f32 %v1698, 0.008333334
        %v1763 = vadd.f32 %v1699, 0.008333334
        %v1764 = vadd.f32 %v1700, 0.008333334
        %v1765 = vadd.f32 %v1701, 0.008333334
        %v1766 = vadd.f32 %v1702, 0.008333334
        %v1767 = vadd.f32 %v1703, 0.008333334
        %v1768 = vadd.f32 %v1704, 0.008333334
        %v1769 = vadd.f32 %v1705, 0.008333334
        %v1770 = vadd.f32 %v1706, 0.008333334
        %v1771 = vadd.f32 %v1707, 0.008333334
        %v1772 = vadd.f32 %v1708, 0.008333334
        %v1773 = vadd.f32 %v1709, 0.008333334
        %v1774 = vadd.f32 %v1710, 0.008333334
        %v1775 = vadd.f32 %v1711, 0.008333334
        %v1776 = vadd.f32 %v1712, 0.008333334
        %v1777 = vadd.f32 %v1713, 0.008333334
        %v1778 = vadd.f32 %v1714, 0.008333334
        %v1779 = vadd.f32 %v1715, 0.008333334
        %v1780 = vadd.f32 %v1716, 0.008333334
        %v1781 = vadd.f32 %v1717, 0.008333334
        %v1782 = vadd.f32 %v1718, 0.008333334
        %v1783 = vadd.f32 %v1719, 0.008333334
        %v1784 = vadd.f32 %v1720, 0.008333334
        %v1785 = vadd.f32 %v1721, 0.008333334
        %v1786 = vadd.f32 %v1722, 0.008333334
        %v1787 = vadd.f32 %v1723, 0.008333334
        %v1788 = vadd.f32 %v1724, 0.008333334
        %v1789 = vadd.f32 %v1725, 0.008333334
        %v1790 = vadd.f32 %v1726, 0.008333334
        %v1791 = vadd.f32 %v1727, 0.008333334
        %v1792 = vadd.f32 %v1728, 0.008333334
        %v1793 = vadd.f32 %v1729, 0.008333334
        %v1794 = vadd.f32 %v1730, 0.008333334
        %v1795 = vadd.f32 %v1731, 0.008333334
        %v1796 = vadd.f32 %v1732, 0.008333334
        %v1797 = vadd.f32 %v1733, 0.008333334
        %v1798 = vadd.f32 %v1734, 0.008333334
        %v1799 = vadd.f32 %v1735, 0.008333334
        %v1800 = vadd.f32 %v1736, 0.008333334
        %v1801 = vadd.f32 %v1737, 0.008333334
        %v1802 = vadd.f32 %v1738, 0.008333334
        %v1803 = vadd.f32 %v1739, 0.008333334
        %v1804 = vadd.f32 %v1740, 0.008333334
        %v1805 = vadd.f32 %v1741, 0.008333334
        %v1806 = vadd.f32 %v1742, 0.008333334
        %v1807 = vadd.f32 %v1743, 0.008333334
        %v1808 = vadd.f32 %v1744, 0.008333334
        %v1809 = vadd.f32 %v1745, 0.008333334
        %v1810 = vadd.f32 %v1746, 0.008333334
        %v1811 = vadd.f32 %v1747, 0.008333334
        %v1812 = vadd.f32 %v1748, 0.008333334
        %v1813 = vadd.f32 %v1749, 0.008333334
        %v1814 = vadd.f32 %v1750, 0.008333334
        %v1815 = vadd.f32 %v1751, 0.008333334
        %v1816 = vadd.f32 %v1752, 0.008333334
        %v1817 = vmul.f32 %v1753, %v1497
        %v1818 = vmul.f32 %v1754, %v1498
        %v1819 = vmul.f32 %v1755, %v1499
        %v1820 = vmul.f32 %v1756, %v1500
        %v1821 = vmul.f32 %v1757, %v1501
        %v1822 = vmul.f32 %v1758, %v1502
        %v1823 = vmul.f32 %v1759, %v1503
        %v1824 = vmul.f32 %v1760, %v1504
        %v1825 = vmul.f32 %v1761, %v1505
        %v1826 = vmul.f32 %v1762, %v1506
        %v1827 = vmul.f32 %v1763, %v1507
        %v1828 = vmul.f32 %v1764, %v1508
        %v1829 = vmul.f32 %v1765, %v1509
        %v1830 = vmul.f32 %v1766, %v1510
        %v1831 = vmul.f32 %v1767, %v1511
        %v1832 = vmul.f32 %v1768, %v1512
        %v1833 = vmul.f32 %v1769, %v1513
        %v1834 = vmul.f32 %v1770, %v1514
        %v1835 = vmul.f32 %v1771, %v1515
        %v1836 = vmul.f32 %v1772, %v1516
        %v1837 = vmul.f32 %v1773, %v1517
        %v1838 = vmul.f32 %v1774, %v1518
        %v1839 = vmul.f32 %v1775, %v1519
        %v1840 = vmul.f32 %v1776, %v1520
        %v1841 = vmul.f32 %v1777, %v1521
        %v1842 = vmul.f32 %v1778, %v1522
        %v1843 = vmul.f32 %v1779, %v1523
        %v1844 = vmul.f32 %v1780, %v1524
        %v1845 = vmul.f32 %v1781, %v1525
        %v1846 = vmul.f32 %v1782, %v1526
        %v1847 = vmul.f32 %v1783, %v1527
        %v1848 = vmul.f32 %v1784, %v1528
        %v1849 = vmul.f32 %v1785, %v1529
        %v1850 = vmul.f32 %v1786, %v1530
        %v1851 = vmul.f32 %v1787, %v1531
        %v1852 = vmul.f32 %v1788, %v1532
        %v1853 = vmul.f32 %v1789, %v1533
        %v1854 = vmul.f32 %v1790, %v1534
        %v1855 = vmul.f32 %v1791, %v1535
        %v1856 = vmul.f32 %v1792, %v1536
        %v1857 = vmul.f32 %v1793, %v1537
        %v1858 = vmul.f32 %v1794, %v1538
        %v1859 = vmul.f32 %v1795, %v1539
        %v1860 = vmul.f32 %v1796, %v1540
        %v1861 = vmul.f32 %v1797, %v1541
        %v1862 = vmul.f32 %v1798, %v1542
        %v1863 = vmul.f32 %v1799, %v1543
        %v1864 = vmul.f32 %v1800, %v1544
        %v1865 = vmul.f32 %v1801, %v1545
        %v1866 = vmul.f32 %v1802, %v1546
        %v1867 = vmul.f32 %v1803, %v1547
        %v1868 = vmul.f32 %v1804, %v1548
        %v1869 = vmul.f32 %v1805, %v1549
        %v1870 = vmul.f32 %v1806, %v1550
        %v1871 = vmul.f32 %v1807, %v1551
        %v1872 = vmul.f32 %v1808, %v1552
        %v1873 = vmul.f32 %v1809, %v1553
        %v1874 = vmul.f32 %v1810, %v1554
        %v1875 = vmul.f32 %v1811, %v1555
        %v1876 = vmul.f32 %v1812, %v1556
        %v1877 = vmul.f32 %v1813, %v1557
        %v1878 = vmul.f32 %v1814, %v1558
        %v1879 = vmul.f32 %v1815, %v1559
        %v1880 = vmul.f32 %v1816, %v1560
        %v1881 = vadd.f32 %v1817, -0.16666667
        %v1882 = vadd.f32 %v1818, -0.16666667
        %v1883 = vadd.f32 %v1819, -0.16666667
        %v1884 = vadd.f32 %v1820, -0.16666667
        %v1885 = vadd.f32 %v1821, -0.16666667
        %v1886 = vadd.f32 %v1822, -0.16666667
        %v1887 = vadd.f32 %v1823, -0.16666667
        %v1888 = vadd.f32 %v1824, -0.16666667
        %v1889 = vadd.f32 %v1825, -0.16666667
        %v1890 = vadd.f32 %v1826, -0.16666667
        %v1891 = vadd.f32 %v1827, -0.16666667
        %v1892 = vadd.f32 %v1828, -0.16666667
        %v1893 = vadd.f32 %v1829, -0.16666667
        %v1894 = vadd.f32 %v1830, -0.16666667
        %v1895 = vadd.f32 %v1831, -0.16666667
        %v1896 = vadd.f32 %v1832, -0.16666667
        %v1897 = vadd.f32 %v1833, -0.16666667
        %v1898 = vadd.f32 %v1834, -0.16666667
        %v1899 = vadd.f32 %v1835, -0.16666667
        %v1900 = vadd.f32 %v1836, -0.16666667
        %v1901 = vadd.f32 %v1837, -0.16666667
        %v1902 = vadd.f32 %v1838, -0.16666667
        %v1903 = vadd.f32 %v1839, -0.16666667
        %v1904 = vadd.f32 %v1840, -0.16666667
        %v1905 = vadd.f32 %v1841, -0.16666667
        %v1906 = vadd.f32 %v1842, -0.16666667
        %v1907 = vadd.f32 %v1843, -0.16666667
        %v1908 = vadd.f32 %v1844, -0.16666667
        %v1909 = vadd.f32 %v1845, -0.16666667
        %v1910 = vadd.f32 %v1846, -0.16666667
        %v1911 = vadd.f32 %v1847, -0.16666667
        %v1912 = vadd.f32 %v1848, -0.16666667
        %v1913 = vadd.f32 %v1849, -0.16666667
        %v1914 = vadd.f32 %v1850, -0.16666667
        %v1915 = vadd.f32 %v1851, -0.16666667
        %v1916 = vadd.f32 %v1852, -0.16666667
        %v1917 = vadd.f32 %v1853, -0.16666667
        %v1918 = vadd.f32 %v1854, -0.16666667
        %v1919 = vadd.f32 %v1855, -0.16666667
        %v1920 = vadd.f32 %v1856, -0.16666667
        %v1921 = vadd.f32 %v1857, -0.16666667
        %v1922 = vadd.f32 %v1858, -0.16666667
        %v1923 = vadd.f32 %v1859, -0.16666667
        %v1924 = vadd.f32 %v1860, -0.16666667
        %v1925 = vadd.f32 %v1861, -0.16666667
        %v1926 = vadd.f32 %v1862, -0.16666667
        %v1927 = vadd.f32 %v1863, -0.16666667
        %v1928 = vadd.f32 %v1864, -0.16666667
        %v1929 = vadd.f32 %v1865, -0.16666667
        %v1930 = vadd.f32 %v1866, -0.16666667
        %v1931 = vadd.f32 %v1867, -0.16666667
        %v1932 = vadd.f32 %v1868, -0.16666667
        %v1933 = vadd.f32 %v1869, -0.16666667
        %v1934 = vadd.f32 %v1870, -0.16666667
        %v1935 = vadd.f32 %v1871, -0.16666667
        %v1936 = vadd.f32 %v1872, -0.16666667
        %v1937 = vadd.f32 %v1873, -0.16666667
        %v1938 = vadd.f32 %v1874, -0.16666667
        %v1939 = vadd.f32 %v1875, -0.16666667
        %v1940 = vadd.f32 %v1876, -0.16666667
        %v1941 = vadd.f32 %v1877, -0.16666667
        %v1942 = vadd.f32 %v1878, -0.16666667
        %v1943 = vadd.f32 %v1879, -0.16666667
        %v1944 = vadd.f32 %v1880, -0.16666667
        %v1945 = vmul.f32 %v1433, %v1497
        %v1946 = vmul.f32 %v1434, %v1498
        %v1947 = vmul.f32 %v1435, %v1499
        %v1948 = vmul.f32 %v1436, %v1500
        %v1949 = vmul.f32 %v1437, %v1501
        %v1950 = vmul.f32 %v1438, %v1502
        %v1951 = vmul.f32 %v1439, %v1503
        %v1952 = vmul.f32 %v1440, %v1504
        %v1953 = vmul.f32 %v1441, %v1505
        %v1954 = vmul.f32 %v1442, %v1506
        %v1955 = vmul.f32 %v1443, %v1507
        %v1956 = vmul.f32 %v1444, %v1508
        %v1957 = vmul.f32 %v1445, %v1509
        %v1958 = vmul.f32 %v1446, %v1510
        %v1959 = vmul.f32 %v1447, %v1511
        %v1960 = vmul.f32 %v1448, %v1512
        %v1961 = vmul.f32 %v1449, %v1513
        %v1962 = vmul.f32 %v1450, %v1514
        %v1963 = vmul.f32 %v1451, %v1515
        %v1964 = vmul.f32 %v1452, %v1516
        %v1965 = vmul.f32 %v1453, %v1517
        %v1966 = vmul.f32 %v1454, %v1518
        %v1967 = vmul.f32 %v1455, %v1519
        %v1968 = vmul.f32 %v1456, %v1520
        %v1969 = vmul.f32 %v1457, %v1521
        %v1970 = vmul.f32 %v1458, %v1522
        %v1971 = vmul.f32 %v1459, %v1523
        %v1972 = vmul.f32 %v1460, %v1524
        %v1973 = vmul.f32 %v1461, %v1525
        %v1974 = vmul.f32 %v1462, %v1526
        %v1975 = vmul.f32 %v1463, %v1527
        %v1976 = vmul.f32 %v1464, %v1528
        %v1977 = vmul.f32 %v1465, %v1529
        %v1978 = vmul.f32 %v1466, %v1530
        %v1979 = vmul.f32 %v1467, %v1531
        %v1980 = vmul.f32 %v1468, %v1532
        %v1981 = vmul.f32 %v1469, %v1533
        %v1982 = vmul.f32 %v1470, %v1534
        %v1983 = vmul.f32 %v1471, %v1535
        %v1984 = vmul.f32 %v1472, %v1536
        %v1985 = vmul.f32 %v1473, %v1537
        %v1986 = vmul.f32 %v1474, %v1538
        %v1987 = vmul.f32 %v1475, %v1539
        %v1988 = vmul.f32 %v1476, %v1540
        %v1989 = vmul.f32 %v1477, %v1541
        %v1990 = vmul.f32 %v1478, %v1542
        %v1991 = vmul.f32 %v1479, %v1543
        %v1992 = vmul.f32 %v1480, %v1544
        %v1993 = vmul.f32 %v1481, %v1545
        %v1994 = vmul.f32 %v1482, %v1546
        %v1995 = vmul.f32 %v1483, %v1547
        %v1996 = vmul.f32 %v1484, %v1548
        %v1997 = vmul.f32 %v1485, %v1549
        %v1998 = vmul.f32 %v1486, %v1550
        %v1999 = vmul.f32 %v1487, %v1551
        %v2000 = vmul.f32 %v1488, %v1552
        %v2001 = vmul.f32 %v1489, %v1553
        %v2002 = vmul.f32 %v1490, %v1554
        %v2003 = vmul.f32 %v1491, %v1555
        %v2004 = vmul.f32 %v1492, %v1556
        %v2005 = vmul.f32 %v1493, %v1557
        %v2006 = vmul.f32 %v1494, %v1558
        %v2007 = vmul.f32 %v1495, %v1559
        %v2008 = vmul.f32 %v1496, %v1560
        %v2009 = vmul.f32 %v1945, %v1881
        %v2010 = vmul.f32 %v1946, %v1882
        %v2011 = vmul.f32 %v1947, %v1883
        %v2012 = vmul.f32 %v1948, %v1884
        %v2013 = vmul.f32 %v1949, %v1885
        %v2014 = vmul.f32 %v1950, %v1886
        %v2015 = vmul.f32 %v1951, %v1887
        %v2016 = vmul.f32 %v1952, %v1888
        %v2017 = vmul.f32 %v1953, %v1889
        %v2018 = vmul.f32 %v1954, %v1890
        %v2019 = vmul.f32 %v1955, %v1891
        %v2020 = vmul.f32 %v1956, %v1892
        %v2021 = vmul.f32 %v1957, %v1893
        %v2022 = vmul.f32 %v1958, %v1894
        %v2023 = vmul.f32 %v1959, %v1895
        %v2024 = vmul.f32 %v1960, %v1896
        %v2025 = vmul.f32 %v1961, %v1897
        %v2026 = vmul.f32 %v1962, %v1898
        %v2027 = vmul.f32 %v1963, %v1899
        %v2028 = vmul.f32 %v1964, %v1900
        %v2029 = vmul.f32 %v1965, %v1901
        %v2030 = vmul.f32 %v1966, %v1902
        %v2031 = vmul.f32 %v1967, %v1903
        %v2032 = vmul.f32 %v1968, %v1904
        %v2033 = vmul.f32 %v1969, %v1905
        %v2034 = vmul.f32 %v1970, %v1906
        %v2035 = vmul.f32 %v1971, %v1907
        %v2036 = vmul.f32 %v1972, %v1908
        %v2037 = vmul.f32 %v1973, %v1909
        %v2038 = vmul.f32 %v1974, %v1910
        %v2039 = vmul.f32 %v1975, %v1911
        %v2040 = vmul.f32 %v1976, %v1912
        %v2041 = vmul.f32 %v1977, %v1913
        %v2042 = vmul.f32 %v1978, %v1914
        %v2043 = vmul.f32 %v1979, %v1915
        %v2044 = vmul.f32 %v1980, %v1916
        %v2045 = vmul.f32 %v1981, %v1917
        %v2046 = vmul.f32 %v1982, %v1918
        %v2047 = vmul.f32 %v1983, %v1919
        %v2048 = vmul.f32 %v1984, %v1920
        %v2049 = vmul.f32 %v1985, %v1921
        %v2050 = vmul.f32 %v1986, %v1922
        %v2051 = vmul.f32 %v1987, %v1923
        %v2052 = vmul.f32 %v1988, %v1924
        %v2053 = vmul.f32 %v1989, %v1925
        %v2054 = vmul.f32 %v1990, %v1926
        %v2055 = vmul.f32 %v1991, %v1927
        %v2056 = vmul.f32 %v1992, %v1928
        %v2057 = vmul.f32 %v1993, %v1929
        %v2058 = vmul.f32 %v1994, %v1930
        %v2059 = vmul.f32 %v1995, %v1931
        %v2060 = vmul.f32 %v1996, %v1932
        %v2061 = vmul.f32 %v1997, %v1933
        %v2062 = vmul.f32 %v1998, %v1934
        %v2063 = vmul.f32 %v1999, %v1935
        %v2064 = vmul.f32 %v2000, %v1936
        %v2065 = vmul.f32 %v2001, %v1937
        %v2066 = vmul.f32 %v2002, %v1938
        %v2067 = vmul.f32 %v2003, %v1939
        %v2068 = vmul.f32 %v2004, %v1940
        %v2069 = vmul.f32 %v2005, %v1941
        %v2070 = vmul.f32 %v2006, %v1942
        %v2071 = vmul.f32 %v2007, %v1943
        %v2072 = vmul.f32 %v2008, %v1944
        %v2073 = vadd.f32 %v1433, %v2009
        %v2074 = vadd.f32 %v1434, %v2010
        %v2075 = vadd.f32 %v1435, %v2011
        %v2076 = vadd.f32 %v1436, %v2012
        %v2077 = vadd.f32 %v1437, %v2013
        %v2078 = vadd.f32 %v1438, %v2014
        %v2079 = vadd.f32 %v1439, %v2015
        %v2080 = vadd.f32 %v1440, %v2016
        %v2081 = vadd.f32 %v1441, %v2017
        %v2082 = vadd.f32 %v1442, %v2018
        %v2083 = vadd.f32 %v1443, %v2019
        %v2084 = vadd.f32 %v1444, %v2020
        %v2085 = vadd.f32 %v1445, %v2021
        %v2086 = vadd.f32 %v1446, %v2022
        %v2087 = vadd.f32 %v1447, %v2023
        %v2088 = vadd.f32 %v1448, %v2024
        %v2089 = vadd.f32 %v1449, %v2025
        %v2090 = vadd.f32 %v1450, %v2026
        %v2091 = vadd.f32 %v1451, %v2027
        %v2092 = vadd.f32 %v1452, %v2028
        %v2093 = vadd.f32 %v1453, %v2029
        %v2094 = vadd.f32 %v1454, %v2030
        %v2095 = vadd.f32 %v1455, %v2031
        %v2096 = vadd.f32 %v1456, %v2032
        %v2097 = vadd.f32 %v1457, %v2033
        %v2098 = vadd.f32 %v1458, %v2034
        %v2099 = vadd.f32 %v1459, %v2035
        %v2100 = vadd.f32 %v1460, %v2036
        %v2101 = vadd.f32 %v1461, %v2037
        %v2102 = vadd.f32 %v1462, %v2038
        %v2103 = vadd.f32 %v1463, %v2039
        %v2104 = vadd.f32 %v1464, %v2040
        %v2105 = vadd.f32 %v1465, %v2041
        %v2106 = vadd.f32 %v1466, %v2042
        %v2107 = vadd.f32 %v1467, %v2043
        %v2108 = vadd.f32 %v1468, %v2044
        %v2109 = vadd.f32 %v1469, %v2045
        %v2110 = vadd.f32 %v1470, %v2046
        %v2111 = vadd.f32 %v1471, %v2047
        %v2112 = vadd.f32 %v1472, %v2048
        %v2113 = vadd.f32 %v1473, %v2049
        %v2114 = vadd.f32 %v1474, %v2050
        %v2115 = vadd.f32 %v1475, %v2051
        %v2116 = vadd.f32 %v1476, %v2052
        %v2117 = vadd.f32 %v1477, %v2053
        %v2118 = vadd.f32 %v1478, %v2054
        %v2119 = vadd.f32 %v1479, %v2055
        %v2120 = vadd.f32 %v1480, %v2056
        %v2121 = vadd.f32 %v1481, %v2057
        %v2122 = vadd.f32 %v1482, %v2058
        %v2123 = vadd.f32 %v1483, %v2059
        %v2124 = vadd.f32 %v1484, %v2060
        %v2125 = vadd.f32 %v1485, %v2061
        %v2126 = vadd.f32 %v1486, %v2062
        %v2127 = vadd.f32 %v1487, %v2063
        %v2128 = vadd.f32 %v1488, %v2064
        %v2129 = vadd.f32 %v1489, %v2065
        %v2130 = vadd.f32 %v1490, %v2066
        %v2131 = vadd.f32 %v1491, %v2067
        %v2132 = vadd.f32 %v1492, %v2068
        %v2133 = vadd.f32 %v1493, %v2069
        %v2134 = vadd.f32 %v1494, %v2070
        %v2135 = vadd.f32 %v1495, %v2071
        %v2136 = vadd.f32 %v1496, %v2072
        %v2137 = vld [vmem:[%s2] sm:$0xff]
        %v2138 = vld [vmem:[%s2 + $0x8] sm:$0xff]
        %v2139 = vld [vmem:[%s2 + $0x10] sm:$0xff]
        %v2140 = vld [vmem:[%s2 + $0x18] sm:$0xff]
        %2142 = vset.pattern.permute.xlu0 32
        %2143 = vperm.xlu0 %2142, %v2137
        %v2144 = vpop.permute.xlu0 %2143
        %2147 = vset.pattern.permute.xlu0 32
        %2148 = vperm.xlu0 %2147, %v2138
        %v2149 = vpop.permute.xlu0 %2148
        %2152 = vset.pattern.permute.xlu0 32
        %2153 = vperm.xlu0 %2152, %v2139
        %v2154 = vpop.permute.xlu0 %2153
        %2157 = vset.pattern.permute.xlu0 32
        %2158 = vperm.xlu0 %2157, %v2140
        %v2159 = vpop.permute.xlu0 %2158
        %vm2161 = vcmask 261120
        %v2162 = vsel %vm2161, %v2137, 0
        %v2164 = vsel %vm2161, %v2138, 0
        %v2166 = vsel %vm2161, %v2139, 0
        %v2168 = vsel %vm2161, %v2140, 0
        %2170 = vmatprep.subr.mxu0 %v2074
        %2171 = vmatpush1.msra.mxu0 %v2073
        %2172 = vmatprep.subr.mxu0 %v2078
        %2173 = vmatpush1.msra.mxu0 %v2077
        %2174 = vmatprep.subr.mxu0 %v2082
        %2175 = vmatpush1.msra.mxu0 %v2081
        %2176 = vmatprep.subr.mxu0 %v2086
        %2177 = vmatpush1.msra.mxu0 %v2085
        %2178 = vmatprep.subr.mxu0 0.0
        %2179 = vmatpush1.msra.mxu0 0.0
        %2180 = vmatprep.subr.mxu0 0.0
        %2181 = vmatpush1.msra.mxu0 0.0
        %2182 = vmatprep.subr.mxu0 0.0
        %2183 = vmatpush1.msra.mxu0 0.0
        %2184 = vmatprep.subr.mxu0 0.0
        %2185 = vmatpush1.msra.mxu0 0.0
        %2186 = vmatprep.subr.mxu0 0.0
        %2187 = vmatpush1.msra.mxu0 0.0
        %2188 = vmatprep.subr.mxu0 0.0
        %2189 = vmatpush1.msra.mxu0 0.0
        %2190 = vmatprep.subr.mxu0 0.0
        %2191 = vmatpush1.msra.mxu0 0.0
        %2192 = vmatprep.subr.mxu0 0.0
        %2193 = vmatpush1.msra.mxu0 0.0
        %2194 = vmatprep.subr.mxu0 0.0
        %2195 = vmatpush1.msra.mxu0 0.0
        %2196 = vmatprep.subr.mxu0 0.0
        %2197 = vmatpush1.msra.mxu0 0.0
        %2198 = vmatprep.subr.mxu0 0.0
        %2199 = vmatpush1.msra.mxu0 0.0
        %2200 = vmatprep.subr.mxu0 0.0
        %2201 = vmatpush1.msra.mxu0 0.0
        %2202 = vmatprep.subr.mxu0 0.0
        %2203 = vmatpush1.msra.mxu0 0.0
        %2204 = vmatprep.subr.mxu0 0.0
        %2205 = vmatpush1.msra.mxu0 0.0
        %2206 = vmatprep.subr.mxu0 0.0
        %2207 = vmatpush1.msra.mxu0 0.0
        %2208 = vmatprep.subr.mxu0 0.0
        %2209 = vmatpush1.msra.mxu0 0.0
        %2210 = vmatprep.subr.mxu0 0.0
        %2211 = vmatpush1.msra.mxu0 0.0
        %2212 = vmatprep.subr.mxu0 0.0
        %2213 = vmatpush1.msra.mxu0 0.0
        %2214 = vmatprep.subr.mxu0 0.0
        %2215 = vmatpush1.msra.mxu0 0.0
        %2216 = vmatprep.subr.mxu0 0.0
        %2217 = vmatpush1.msra.mxu0 0.0
        %2218 = vmatprep.subr.mxu0 0.0
        %2219 = vmatpush1.msra.mxu0 0.0
        %2220 = vmatprep.subr.mxu0 0.0
        %2221 = vmatpush1.msra.mxu0 0.0
        %2222 = vmatprep.subr.mxu0 0.0
        %2223 = vmatpush1.msra.mxu0 0.0
        %2224 = vmatprep.subr.mxu0 0.0
        %2225 = vmatpush1.msra.mxu0 0.0
        %2226 = vmatprep.subr.mxu0 0.0
        %2227 = vmatpush1.msra.mxu0 0.0
        %2228 = vmatprep.subr.mxu0 0.0
        %2229 = vmatpush1.msra.mxu0 0.0
        %2230 = vmatprep.subr.mxu0 0.0
        %2231 = vmatpush1.msra.mxu0 0.0
        %2232 = vmatprep.subr.mxu0 0.0
        %2233 = vmatpush1.msra.mxu0 0.0
        %2234 = vmatprep.mubr.f32.mxu0 0.0
        %2235 = vmatmul.mubr.f32.gmra.mrb[0].mxu0 %v2162
        %v2236 = vpop.f32.mrb[0].mxu0
        %v2237 = vadd.f32 %v2144, %v2236
        %v2238 = vpop.f32.mrb[0].mxu0
        %v2239 = vadd.f32 %v2144, %v2238
        %2240 = vmatprep.mubr.f32.mxu0 0.0
        %2241 = vmatmul.mubr.f32.gmra.mrb[0].mxu0 %v2164
        %v2242 = vpop.f32.mrb[0].mxu0
        %v2243 = vadd.f32 %v2149, %v2242
        %v2244 = vpop.f32.mrb[0].mxu0
        %v2245 = vadd.f32 %v2149, %v2244
        %2246 = vmatprep.mubr.f32.mxu0 0.0
        %2247 = vmatmul.mubr.f32.gmra.mrb[0].mxu0 %v2166
        %v2248 = vpop.f32.mrb[0].mxu0
        %v2249 = vadd.f32 %v2154, %v2248
        %v2250 = vpop.f32.mrb[0].mxu0
        %v2251 = vadd.f32 %v2154, %v2250
        %2252 = vmatprep.mubr.f32.mxu0 0.0
        %2253 = vmatmul.mubr.f32.gmra.mrb[0].mxu0 %v2168
        %v2254 = vpop.f32.mrb[0].mxu0
        %v2255 = vadd.f32 %v2159, %v2254
        %v2256 = vpop.f32.mrb[0].mxu0
        %v2257 = vadd.f32 %v2159, %v2256
        %2258 = vdwg.mxu0
        %2259 = vmatprep.subr.mxu0 %v2076
        %2260 = vmatpush1.msra.mxu0 %v2075
        %2261 = vmatprep.subr.mxu0 %v2080
        %2262 = vmatpush1.msra.mxu0 %v2079
        %2263 = vmatprep.subr.mxu0 %v2084
        %2264 = vmatpush1.msra.mxu0 %v2083
        %2265 = vmatprep.subr.mxu0 %v2088
        %2266 = vmatpush1.msra.mxu0 %v2087
        %2267 = vmatprep.subr.mxu0 0.0
        %2268 = vmatpush1.msra.mxu0 0.0
        %2269 = vmatprep.subr.mxu0 0.0
        %2270 = vmatpush1.msra.mxu0 0.0
        %2271 = vmatprep.subr.mxu0 0.0
        %2272 = vmatpush1.msra.mxu0 0.0
        %2273 = vmatprep.subr.mxu0 0.0
        %2274 = vmatpush1.msra.mxu0 0.0
        %2275 = vmatprep.subr.mxu0 0.0
        %2276 = vmatpush1.msra.mxu0 0.0
        %2277 = vmatprep.subr.mxu0 0.0
        %2278 = vmatpush1.msra.mxu0 0.0
        %2279 = vmatprep.subr.mxu0 0.0
        %2280 = vmatpush1.msra.mxu0 0.0
        %2281 = vmatprep.subr.mxu0 0.0
        %2282 = vmatpush1.msra.mxu0 0.0
        %2283 = vmatprep.subr.mxu0 0.0
        %2284 = vmatpush1.msra.mxu0 0.0
        %2285 = vmatprep.subr.mxu0 0.0
        %2286 = vmatpush1.msra.mxu0 0.0
        %2287 = vmatprep.subr.mxu0 0.0
        %2288 = vmatpush1.msra.mxu0 0.0
        %2289 = vmatprep.subr.mxu0 0.0
        %2290 = vmatpush1.msra.mxu0 0.0
        %2291 = vmatprep.subr.mxu0 0.0
        %2292 = vmatpush1.msra.mxu0 0.0
        %2293 = vmatprep.subr.mxu0 0.0
        %2294 = vmatpush1.msra.mxu0 0.0
        %2295 = vmatprep.subr.mxu0 0.0
        %2296 = vmatpush1.msra.mxu0 0.0
        %2297 = vmatprep.subr.mxu0 0.0
        %2298 = vmatpush1.msra.mxu0 0.0
        %2299 = vmatprep.subr.mxu0 0.0
        %2300 = vmatpush1.msra.mxu0 0.0
        %2301 = vmatprep.subr.mxu0 0.0
        %2302 = vmatpush1.msra.mxu0 0.0
        %2303 = vmatprep.subr.mxu0 0.0
        %2304 = vmatpush1.msra.mxu0 0.0
        %2305 = vmatprep.subr.mxu0 0.0
        %2306 = vmatpush1.msra.mxu0 0.0
        %2307 = vmatprep.subr.mxu0 0.0
        %2308 = vmatpush1.msra.mxu0 0.0
        %2309 = vmatprep.subr.mxu0 0.0
        %2310 = vmatpush1.msra.mxu0 0.0
        %2311 = vmatprep.subr.mxu0 0.0
        %2312 = vmatpush1.msra.mxu0 0.0
        %2313 = vmatprep.subr.mxu0 0.0
        %2314 = vmatpush1.msra.mxu0 0.0
        %2315 = vmatprep.subr.mxu0 0.0
        %2316 = vmatpush1.msra.mxu0 0.0
        %2317 = vmatprep.subr.mxu0 0.0
        %2318 = vmatpush1.msra.mxu0 0.0
        %2319 = vmatprep.subr.mxu0 0.0
        %2320 = vmatpush1.msra.mxu0 0.0
        %2321 = vmatprep.subr.mxu0 0.0
        %2322 = vmatpush1.msra.mxu0 0.0
        %2323 = vmatprep.mubr.f32.mxu0 0.0
        %2324 = vmatmul.mubr.f32.gmra.mrb[0].mxu0 %v2162
        %v2325 = vpop.f32.mrb[0].mxu0
        %v2326 = vadd.f32 %v2144, %v2325
        %v2327 = vpop.f32.mrb[0].mxu0
        %v2328 = vadd.f32 %v2144, %v2327
        %2329 = vmatprep.mubr.f32.mxu0 0.0
        %2330 = vmatmul.mubr.f32.gmra.mrb[0].mxu0 %v2164
        %v2331 = vpop.f32.mrb[0].mxu0
        %v2332 = vadd.f32 %v2149, %v2331
        %v2333 = vpop.f32.mrb[0].mxu0
        %v2334 = vadd.f32 %v2149, %v2333
        %2335 = vmatprep.mubr.f32.mxu0 0.0
        %2336 = vmatmul.mubr.f32.gmra.mrb[0].mxu0 %v2166
        %v2337 = vpop.f32.mrb[0].mxu0
        %v2338 = vadd.f32 %v2154, %v2337
        %v2339 = vpop.f32.mrb[0].mxu0
        %v2340 = vadd.f32 %v2154, %v2339
        %2341 = vmatprep.mubr.f32.mxu0 0.0
        %2342 = vmatmul.mubr.f32.gmra.mrb[0].mxu0 %v2168
        %v2343 = vpop.f32.mrb[0].mxu0
        %v2344 = vadd.f32 %v2159, %v2343
        %v2345 = vpop.f32.mrb[0].mxu0
        %v2346 = vadd.f32 %v2159, %v2345
        %2347 = vdwg.mxu0
        %v2348 = vmul.f32 %v2089, %v2237
        %v2349 = vmul.f32 %v2090, %v2239
        %v2350 = vmul.f32 %v2091, %v2326
        %v2351 = vmul.f32 %v2092, %v2328
        %v2352 = vmul.f32 %v2093, %v2243
        %v2353 = vmul.f32 %v2094, %v2245
        %v2354 = vmul.f32 %v2095, %v2332
        %v2355 = vmul.f32 %v2096, %v2334
        %v2356 = vmul.f32 %v2097, %v2249
        %v2357 = vmul.f32 %v2098, %v2251
        %v2358 = vmul.f32 %v2099, %v2338
        %v2359 = vmul.f32 %v2100, %v2340
        %v2360 = vmul.f32 %v2101, %v2255
        %v2361 = vmul.f32 %v2102, %v2257
        %v2362 = vmul.f32 %v2103, %v2344
        %v2363 = vmul.f32 %v2104, %v2346
        %s2364 = scalar_lea.vmem %s2, 32
        %v2365 = vld [vmem:[%s2364] sm:$0xff]
        %v2366 = vld [vmem:[%s2364 + $0x8] sm:$0xff]
        %v2367 = vld [vmem:[%s2364 + $0x10] sm:$0xff]
        %v2368 = vld [vmem:[%s2364 + $0x18] sm:$0xff]
        %2370 = vset.pattern.permute.xlu0 32
        %2371 = vperm.xlu0 %2370, %v2365
        %v2372 = vpop.permute.xlu0 %2371
        %2375 = vset.pattern.permute.xlu0 32
        %2376 = vperm.xlu0 %2375, %v2366
        %v2377 = vpop.permute.xlu0 %2376
        %2380 = vset.pattern.permute.xlu0 32
        %2381 = vperm.xlu0 %2380, %v2367
        %v2382 = vpop.permute.xlu0 %2381
        %2385 = vset.pattern.permute.xlu0 32
        %2386 = vperm.xlu0 %2385, %v2368
        %v2387 = vpop.permute.xlu0 %2386
        %v2389 = vsel %vm2161, %v2365, 0
        %v2391 = vsel %vm2161, %v2366, 0
        %v2393 = vsel %vm2161, %v2367, 0
        %v2395 = vsel %vm2161, %v2368, 0
        %2397 = vmatprep.subr.mxu0 %v2349
        %2398 = vmatpush1.msra.mxu0 %v2348
        %2399 = vmatprep.subr.mxu0 %v2353
        %2400 = vmatpush1.msra.mxu0 %v2352
        %2401 = vmatprep.subr.mxu0 %v2357
        %2402 = vmatpush1.msra.mxu0 %v2356
        %2403 = vmatprep.subr.mxu0 %v2361
        %2404 = vmatpush1.msra.mxu0 %v2360
        %2405 = vmatprep.subr.mxu0 0.0
        %2406 = vmatpush1.msra.mxu0 0.0
        %2407 = vmatprep.subr.mxu0 0.0
        %2408 = vmatpush1.msra.mxu0 0.0
        %2409 = vmatprep.subr.mxu0 0.0
        %2410 = vmatpush1.msra.mxu0 0.0
        %2411 = vmatprep.subr.mxu0 0.0
        %2412 = vmatpush1.msra.mxu0 0.0
        %2413 = vmatprep.subr.mxu0 0.0
        %2414 = vmatpush1.msra.mxu0 0.0
        %2415 = vmatprep.subr.mxu0 0.0
        %2416 = vmatpush1.msra.mxu0 0.0
        %2417 = vmatprep.subr.mxu0 0.0
        %2418 = vmatpush1.msra.mxu0 0.0
        %2419 = vmatprep.subr.mxu0 0.0
        %2420 = vmatpush1.msra.mxu0 0.0
        %2421 = vmatprep.subr.mxu0 0.0
        %2422 = vmatpush1.msra.mxu0 0.0
        %2423 = vmatprep.subr.mxu0 0.0
        %2424 = vmatpush1.msra.mxu0 0.0
        %2425 = vmatprep.subr.mxu0 0.0
        %2426 = vmatpush1.msra.mxu0 0.0
        %2427 = vmatprep.subr.mxu0 0.0
        %2428 = vmatpush1.msra.mxu0 0.0
        %2429 = vmatprep.subr.mxu0 0.0
        %2430 = vmatpush1.msra.mxu0 0.0
        %2431 = vmatprep.subr.mxu0 0.0
        %2432 = vmatpush1.msra.mxu0 0.0
        %2433 = vmatprep.subr.mxu0 0.0
        %2434 = vmatpush1.msra.mxu0 0.0
        %2435 = vmatprep.subr.mxu0 0.0
        %2436 = vmatpush1.msra.mxu0 0.0
        %2437 = vmatprep.subr.mxu0 0.0
        %2438 = vmatpush1.msra.mxu0 0.0
        %2439 = vmatprep.subr.mxu0 0.0
        %2440 = vmatpush1.msra.mxu0 0.0
        %2441 = vmatprep.subr.mxu0 0.0
        %2442 = vmatpush1.msra.mxu0 0.0
        %2443 = vmatprep.subr.mxu0 0.0
        %2444 = vmatpush1.msra.mxu0 0.0
        %2445 = vmatprep.subr.mxu0 0.0
        %2446 = vmatpush1.msra.mxu0 0.0
        %2447 = vmatprep.subr.mxu0 0.0
        %2448 = vmatpush1.msra.mxu0 0.0
        %2449 = vmatprep.subr.mxu0 0.0
        %2450 = vmatpush1.msra.mxu0 0.0
        %2451 = vmatprep.subr.mxu0 0.0
        %2452 = vmatpush1.msra.mxu0 0.0
        %2453 = vmatprep.subr.mxu0 0.0
        %2454 = vmatpush1.msra.mxu0 0.0
        %2455 = vmatprep.subr.mxu0 0.0
        %2456 = vmatpush1.msra.mxu0 0.0
        %2457 = vmatprep.subr.mxu0 0.0
        %2458 = vmatpush1.msra.mxu0 0.0
        %2459 = vmatprep.subr.mxu0 0.0
        %2460 = vmatpush1.msra.mxu0 0.0
        %2461 = vmatprep.mubr.f32.mxu0 0.0
        %2462 = vmatmul.mubr.f32.gmra.mrb[0].mxu0 %v2389
        %v2463 = vpop.f32.mrb[0].mxu0
        %v2464 = vadd.f32 %v2372, %v2463
        %v2465 = vpop.f32.mrb[0].mxu0
        %v2466 = vadd.f32 %v2372, %v2465
        %2467 = vmatprep.mubr.f32.mxu0 0.0
        %2468 = vmatmul.mubr.f32.gmra.mrb[0].mxu0 %v2391
        %v2469 = vpop.f32.mrb[0].mxu0
        %v2470 = vadd.f32 %v2377, %v2469
        %v2471 = vpop.f32.mrb[0].mxu0
        %v2472 = vadd.f32 %v2377, %v2471
        %2473 = vmatprep.mubr.f32.mxu0 0.0
        %2474 = vmatmul.mubr.f32.gmra.mrb[0].mxu0 %v2393
        %v2475 = vpop.f32.mrb[0].mxu0
        %v2476 = vadd.f32 %v2382, %v2475
        %v2477 = vpop.f32.mrb[0].mxu0
        %v2478 = vadd.f32 %v2382, %v2477
        %2479 = vmatprep.mubr.f32.mxu0 0.0
        %2480 = vmatmul.mubr.f32.gmra.mrb[0].mxu0 %v2395
        %v2481 = vpop.f32.mrb[0].mxu0
        %v2482 = vadd.f32 %v2387, %v2481
        %v2483 = vpop.f32.mrb[0].mxu0
        %v2484 = vadd.f32 %v2387, %v2483
        %2485 = vdwg.mxu0
        %2486 = vmatprep.subr.mxu0 %v2351
        %2487 = vmatpush1.msra.mxu0 %v2350
        %2488 = vmatprep.subr.mxu0 %v2355
        %2489 = vmatpush1.msra.mxu0 %v2354
        %2490 = vmatprep.subr.mxu0 %v2359
        %2491 = vmatpush1.msra.mxu0 %v2358
        %2492 = vmatprep.subr.mxu0 %v2363
        %2493 = vmatpush1.msra.mxu0 %v2362
        %2494 = vmatprep.subr.mxu0 0.0
        %2495 = vmatpush1.msra.mxu0 0.0
        %2496 = vmatprep.subr.mxu0 0.0
        %2497 = vmatpush1.msra.mxu0 0.0
        %2498 = vmatprep.subr.mxu0 0.0
        %2499 = vmatpush1.msra.mxu0 0.0
        %2500 = vmatprep.subr.mxu0 0.0
        %2501 = vmatpush1.msra.mxu0 0.0
        %2502 = vmatprep.subr.mxu0 0.0
        %2503 = vmatpush1.msra.mxu0 0.0
        %2504 = vmatprep.subr.mxu0 0.0
        %2505 = vmatpush1.msra.mxu0 0.0
        %2506 = vmatprep.subr.mxu0 0.0
        %2507 = vmatpush1.msra.mxu0 0.0
        %2508 = vmatprep.subr.mxu0 0.0
        %2509 = vmatpush1.msra.mxu0 0.0
        %2510 = vmatprep.subr.mxu0 0.0
        %2511 = vmatpush1.msra.mxu0 0.0
        %2512 = vmatprep.subr.mxu0 0.0
        %2513 = vmatpush1.msra.mxu0 0.0
        %2514 = vmatprep.subr.mxu0 0.0
        %2515 = vmatpush1.msra.mxu0 0.0
        %2516 = vmatprep.subr.mxu0 0.0
        %2517 = vmatpush1.msra.mxu0 0.0
        %2518 = vmatprep.subr.mxu0 0.0
        %2519 = vmatpush1.msra.mxu0 0.0
        %2520 = vmatprep.subr.mxu0 0.0
        %2521 = vmatpush1.msra.mxu0 0.0
        %2522 = vmatprep.subr.mxu0 0.0
        %2523 = vmatpush1.msra.mxu0 0.0
        %2524 = vmatprep.subr.mxu0 0.0
        %2525 = vmatpush1.msra.mxu0 0.0
        %2526 = vmatprep.subr.mxu0 0.0
        %2527 = vmatpush1.msra.mxu0 0.0
        %2528 = vmatprep.subr.mxu0 0.0
        %2529 = vmatpush1.msra.mxu0 0.0
        %2530 = vmatprep.subr.mxu0 0.0
        %2531 = vmatpush1.msra.mxu0 0.0
        %2532 = vmatprep.subr.mxu0 0.0
        %2533 = vmatpush1.msra.mxu0 0.0
        %2534 = vmatprep.subr.mxu0 0.0
        %2535 = vmatpush1.msra.mxu0 0.0
        %2536 = vmatprep.subr.mxu0 0.0
        %2537 = vmatpush1.msra.mxu0 0.0
        %2538 = vmatprep.subr.mxu0 0.0
        %2539 = vmatpush1.msra.mxu0 0.0
        %2540 = vmatprep.subr.mxu0 0.0
        %2541 = vmatpush1.msra.mxu0 0.0
        %2542 = vmatprep.subr.mxu0 0.0
        %2543 = vmatpush1.msra.mxu0 0.0
        %2544 = vmatprep.subr.mxu0 0.0
        %2545 = vmatpush1.msra.mxu0 0.0
        %2546 = vmatprep.subr.mxu0 0.0
        %2547 = vmatpush1.msra.mxu0 0.0
        %2548 = vmatprep.subr.mxu0 0.0
        %2549 = vmatpush1.msra.mxu0 0.0
        %2550 = vmatprep.mubr.f32.mxu0 0.0
        %2551 = vmatmul.mubr.f32.gmra.mrb[0].mxu0 %v2389
        %v2552 = vpop.f32.mrb[0].mxu0
        %v2553 = vadd.f32 %v2372, %v2552
        %v2554 = vpop.f32.mrb[0].mxu0
        %v2555 = vadd.f32 %v2372, %v2554
        %2556 = vmatprep.mubr.f32.mxu0 0.0
        %2557 = vmatmul.mubr.f32.gmra.mrb[0].mxu0 %v2391
        %v2558 = vpop.f32.mrb[0].mxu0
        %v2559 = vadd.f32 %v2377, %v2558
        %v2560 = vpop.f32.mrb[0].mxu0
        %v2561 = vadd.f32 %v2377, %v2560
        %2562 = vmatprep.mubr.f32.mxu0 0.0
        %2563 = vmatmul.mubr.f32.gmra.mrb[0].mxu0 %v2393
        %v2564 = vpop.f32.mrb[0].mxu0
        %v2565 = vadd.f32 %v2382, %v2564
        %v2566 = vpop.f32.mrb[0].mxu0
        %v2567 = vadd.f32 %v2382, %v2566
        %2568 = vmatprep.mubr.f32.mxu0 0.0
        %2569 = vmatmul.mubr.f32.gmra.mrb[0].mxu0 %v2395
        %v2570 = vpop.f32.mrb[0].mxu0
        %v2571 = vadd.f32 %v2387, %v2570
        %v2572 = vpop.f32.mrb[0].mxu0
        %v2573 = vadd.f32 %v2387, %v2572
        %2574 = vdwg.mxu0
        %v2575 = vmul.f32 %v2105, %v2464
        %v2576 = vmul.f32 %v2106, %v2466
        %v2577 = vmul.f32 %v2107, %v2553
        %v2578 = vmul.f32 %v2108, %v2555
        %v2579 = vmul.f32 %v2109, %v2470
        %v2580 = vmul.f32 %v2110, %v2472
        %v2581 = vmul.f32 %v2111, %v2559
        %v2582 = vmul.f32 %v2112, %v2561
        %v2583 = vmul.f32 %v2113, %v2476
        %v2584 = vmul.f32 %v2114, %v2478
        %v2585 = vmul.f32 %v2115, %v2565
        %v2586 = vmul.f32 %v2116, %v2567
        %v2587 = vmul.f32 %v2117, %v2482
        %v2588 = vmul.f32 %v2118, %v2484
        %v2589 = vmul.f32 %v2119, %v2571
        %v2590 = vmul.f32 %v2120, %v2573
        %s2591 = scalar_lea.vmem %s2, 64
        %v2592 = vld [vmem:[%s2591] sm:$0xff]
        %v2593 = vld [vmem:[%s2591 + $0x8] sm:$0xff]
        %v2594 = vld [vmem:[%s2591 + $0x10] sm:$0xff]
        %v2595 = vld [vmem:[%s2591 + $0x18] sm:$0xff]
        %2597 = vset.pattern.permute.xlu0 32
        %2598 = vperm.xlu0 %2597, %v2592
        %v2599 = vpop.permute.xlu0 %2598
        %2602 = vset.pattern.permute.xlu0 32
        %2603 = vperm.xlu0 %2602, %v2593
        %v2604 = vpop.permute.xlu0 %2603
        %2607 = vset.pattern.permute.xlu0 32
        %2608 = vperm.xlu0 %2607, %v2594
        %v2609 = vpop.permute.xlu0 %2608
        %2612 = vset.pattern.permute.xlu0 32
        %2613 = vperm.xlu0 %2612, %v2595
        %v2614 = vpop.permute.xlu0 %2613
        %v2616 = vsel %vm2161, %v2592, 0
        %v2618 = vsel %vm2161, %v2593, 0
        %v2620 = vsel %vm2161, %v2594, 0
        %v2622 = vsel %vm2161, %v2595, 0
        %2624 = vmatprep.subr.mxu0 %v2576
        %2625 = vmatpush1.msra.mxu0 %v2575
        %2626 = vmatprep.subr.mxu0 %v2580
        %2627 = vmatpush1.msra.mxu0 %v2579
        %2628 = vmatprep.subr.mxu0 %v2584
        %2629 = vmatpush1.msra.mxu0 %v2583
        %2630 = vmatprep.subr.mxu0 %v2588
        %2631 = vmatpush1.msra.mxu0 %v2587
        %2632 = vmatprep.subr.mxu0 0.0
        %2633 = vmatpush1.msra.mxu0 0.0
        %2634 = vmatprep.subr.mxu0 0.0
        %2635 = vmatpush1.msra.mxu0 0.0
        %2636 = vmatprep.subr.mxu0 0.0
        %2637 = vmatpush1.msra.mxu0 0.0
        %2638 = vmatprep.subr.mxu0 0.0
        %2639 = vmatpush1.msra.mxu0 0.0
        %2640 = vmatprep.subr.mxu0 0.0
        %2641 = vmatpush1.msra.mxu0 0.0
        %2642 = vmatprep.subr.mxu0 0.0
        %2643 = vmatpush1.msra.mxu0 0.0
        %2644 = vmatprep.subr.mxu0 0.0
        %2645 = vmatpush1.msra.mxu0 0.0
        %2646 = vmatprep.subr.mxu0 0.0
        %2647 = vmatpush1.msra.mxu0 0.0
        %2648 = vmatprep.subr.mxu0 0.0
        %2649 = vmatpush1.msra.mxu0 0.0
        %2650 = vmatprep.subr.mxu0 0.0
        %2651 = vmatpush1.msra.mxu0 0.0
        %2652 = vmatprep.subr.mxu0 0.0
        %2653 = vmatpush1.msra.mxu0 0.0
        %2654 = vmatprep.subr.mxu0 0.0
        %2655 = vmatpush1.msra.mxu0 0.0
        %2656 = vmatprep.subr.mxu0 0.0
        %2657 = vmatpush1.msra.mxu0 0.0
        %2658 = vmatprep.subr.mxu0 0.0
        %2659 = vmatpush1.msra.mxu0 0.0
        %2660 = vmatprep.subr.mxu0 0.0
        %2661 = vmatpush1.msra.mxu0 0.0
        %2662 = vmatprep.subr.mxu0 0.0
        %2663 = vmatpush1.msra.mxu0 0.0
        %2664 = vmatprep.subr.mxu0 0.0
        %2665 = vmatpush1.msra.mxu0 0.0
        %2666 = vmatprep.subr.mxu0 0.0
        %2667 = vmatpush1.msra.mxu0 0.0
        %2668 = vmatprep.subr.mxu0 0.0
        %2669 = vmatpush1.msra.mxu0 0.0
        %2670 = vmatprep.subr.mxu0 0.0
        %2671 = vmatpush1.msra.mxu0 0.0
        %2672 = vmatprep.subr.mxu0 0.0
        %2673 = vmatpush1.msra.mxu0 0.0
        %2674 = vmatprep.subr.mxu0 0.0
        %2675 = vmatpush1.msra.mxu0 0.0
        %2676 = vmatprep.subr.mxu0 0.0
        %2677 = vmatpush1.msra.mxu0 0.0
        %2678 = vmatprep.subr.mxu0 0.0
        %2679 = vmatpush1.msra.mxu0 0.0
        %2680 = vmatprep.subr.mxu0 0.0
        %2681 = vmatpush1.msra.mxu0 0.0
        %2682 = vmatprep.subr.mxu0 0.0
        %2683 = vmatpush1.msra.mxu0 0.0
        %2684 = vmatprep.subr.mxu0 0.0
        %2685 = vmatpush1.msra.mxu0 0.0
        %2686 = vmatprep.subr.mxu0 0.0
        %2687 = vmatpush1.msra.mxu0 0.0
        %2688 = vmatprep.mubr.f32.mxu0 0.0
        %2689 = vmatmul.mubr.f32.gmra.mrb[0].mxu0 %v2616
        %v2690 = vpop.f32.mrb[0].mxu0
        %v2691 = vadd.f32 %v2599, %v2690
        %v2692 = vpop.f32.mrb[0].mxu0
        %v2693 = vadd.f32 %v2599, %v2692
        %2694 = vmatprep.mubr.f32.mxu0 0.0
        %2695 = vmatmul.mubr.f32.gmra.mrb[0].mxu0 %v2618
        %v2696 = vpop.f32.mrb[0].mxu0
        %v2697 = vadd.f32 %v2604, %v2696
        %v2698 = vpop.f32.mrb[0].mxu0
        %v2699 = vadd.f32 %v2604, %v2698
        %2700 = vmatprep.mubr.f32.mxu0 0.0
        %2701 = vmatmul.mubr.f32.gmra.mrb[0].mxu0 %v2620
        %v2702 = vpop.f32.mrb[0].mxu0
        %v2703 = vadd.f32 %v2609, %v2702
        %v2704 = vpop.f32.mrb[0].mxu0
        %v2705 = vadd.f32 %v2609, %v2704
        %2706 = vmatprep.mubr.f32.mxu0 0.0
        %2707 = vmatmul.mubr.f32.gmra.mrb[0].mxu0 %v2622
        %v2708 = vpop.f32.mrb[0].mxu0
        %v2709 = vadd.f32 %v2614, %v2708
        %v2710 = vpop.f32.mrb[0].mxu0
        %v2711 = vadd.f32 %v2614, %v2710
        %2712 = vdwg.mxu0
        %2713 = vmatprep.subr.mxu0 %v2578
        %2714 = vmatpush1.msra.mxu0 %v2577
        %2715 = vmatprep.subr.mxu0 %v2582
        %2716 = vmatpush1.msra.mxu0 %v2581
        %2717 = vmatprep.subr.mxu0 %v2586
        %2718 = vmatpush1.msra.mxu0 %v2585
        %2719 = vmatprep.subr.mxu0 %v2590
        %2720 = vmatpush1.msra.mxu0 %v2589
        %2721 = vmatprep.subr.mxu0 0.0
        %2722 = vmatpush1.msra.mxu0 0.0
        %2723 = vmatprep.subr.mxu0 0.0
        %2724 = vmatpush1.msra.mxu0 0.0
        %2725 = vmatprep.subr.mxu0 0.0
        %2726 = vmatpush1.msra.mxu0 0.0
        %2727 = vmatprep.subr.mxu0 0.0
        %2728 = vmatpush1.msra.mxu0 0.0
        %2729 = vmatprep.subr.mxu0 0.0
        %2730 = vmatpush1.msra.mxu0 0.0
        %2731 = vmatprep.subr.mxu0 0.0
        %2732 = vmatpush1.msra.mxu0 0.0
        %2733 = vmatprep.subr.mxu0 0.0
        %2734 = vmatpush1.msra.mxu0 0.0
        %2735 = vmatprep.subr.mxu0 0.0
        %2736 = vmatpush1.msra.mxu0 0.0
        %2737 = vmatprep.subr.mxu0 0.0
        %2738 = vmatpush1.msra.mxu0 0.0
        %2739 = vmatprep.subr.mxu0 0.0
        %2740 = vmatpush1.msra.mxu0 0.0
        %2741 = vmatprep.subr.mxu0 0.0
        %2742 = vmatpush1.msra.mxu0 0.0
        %2743 = vmatprep.subr.mxu0 0.0
        %2744 = vmatpush1.msra.mxu0 0.0
        %2745 = vmatprep.subr.mxu0 0.0
        %2746 = vmatpush1.msra.mxu0 0.0
        %2747 = vmatprep.subr.mxu0 0.0
        %2748 = vmatpush1.msra.mxu0 0.0
        %2749 = vmatprep.subr.mxu0 0.0
        %2750 = vmatpush1.msra.mxu0 0.0
        %2751 = vmatprep.subr.mxu0 0.0
        %2752 = vmatpush1.msra.mxu0 0.0
        %2753 = vmatprep.subr.mxu0 0.0
        %2754 = vmatpush1.msra.mxu0 0.0
        %2755 = vmatprep.subr.mxu0 0.0
        %2756 = vmatpush1.msra.mxu0 0.0
        %2757 = vmatprep.subr.mxu0 0.0
        %2758 = vmatpush1.msra.mxu0 0.0
        %2759 = vmatprep.subr.mxu0 0.0
        %2760 = vmatpush1.msra.mxu0 0.0
        %2761 = vmatprep.subr.mxu0 0.0
        %2762 = vmatpush1.msra.mxu0 0.0
        %2763 = vmatprep.subr.mxu0 0.0
        %2764 = vmatpush1.msra.mxu0 0.0
        %2765 = vmatprep.subr.mxu0 0.0
        %2766 = vmatpush1.msra.mxu0 0.0
        %2767 = vmatprep.subr.mxu0 0.0
        %2768 = vmatpush1.msra.mxu0 0.0
        %2769 = vmatprep.subr.mxu0 0.0
        %2770 = vmatpush1.msra.mxu0 0.0
        %2771 = vmatprep.subr.mxu0 0.0
        %2772 = vmatpush1.msra.mxu0 0.0
        %2773 = vmatprep.subr.mxu0 0.0
        %2774 = vmatpush1.msra.mxu0 0.0
        %2775 = vmatprep.subr.mxu0 0.0
        %2776 = vmatpush1.msra.mxu0 0.0
        %2777 = vmatprep.mubr.f32.mxu0 0.0
        %2778 = vmatmul.mubr.f32.gmra.mrb[0].mxu0 %v2616
        %v2779 = vpop.f32.mrb[0].mxu0
        %v2780 = vadd.f32 %v2599, %v2779
        %v2781 = vpop.f32.mrb[0].mxu0
        %v2782 = vadd.f32 %v2599, %v2781
        %2783 = vmatprep.mubr.f32.mxu0 0.0
        %2784 = vmatmul.mubr.f32.gmra.mrb[0].mxu0 %v2618
        %v2785 = vpop.f32.mrb[0].mxu0
        %v2786 = vadd.f32 %v2604, %v2785
        %v2787 = vpop.f32.mrb[0].mxu0
        %v2788 = vadd.f32 %v2604, %v2787
        %2789 = vmatprep.mubr.f32.mxu0 0.0
        %2790 = vmatmul.mubr.f32.gmra.mrb[0].mxu0 %v2620
        %v2791 = vpop.f32.mrb[0].mxu0
        %v2792 = vadd.f32 %v2609, %v2791
        %v2793 = vpop.f32.mrb[0].mxu0
        %v2794 = vadd.f32 %v2609, %v2793
        %2795 = vmatprep.mubr.f32.mxu0 0.0
        %2796 = vmatmul.mubr.f32.gmra.mrb[0].mxu0 %v2622
        %v2797 = vpop.f32.mrb[0].mxu0
        %v2798 = vadd.f32 %v2614, %v2797
        %v2799 = vpop.f32.mrb[0].mxu0
        %v2800 = vadd.f32 %v2614, %v2799
        %2801 = vdwg.mxu0
        %v2802 = vmul.f32 %v2121, %v2691
        %v2803 = vmul.f32 %v2122, %v2693
        %v2804 = vmul.f32 %v2123, %v2780
        %v2805 = vmul.f32 %v2124, %v2782
        %v2806 = vmul.f32 %v2125, %v2697
        %v2807 = vmul.f32 %v2126, %v2699
        %v2808 = vmul.f32 %v2127, %v2786
        %v2809 = vmul.f32 %v2128, %v2788
        %v2810 = vmul.f32 %v2129, %v2703
        %v2811 = vmul.f32 %v2130, %v2705
        %v2812 = vmul.f32 %v2131, %v2792
        %v2813 = vmul.f32 %v2132, %v2794
        %v2814 = vmul.f32 %v2133, %v2709
        %v2815 = vmul.f32 %v2134, %v2711
        %v2816 = vmul.f32 %v2135, %v2798
        %v2817 = vmul.f32 %v2136, %v2800
        %v2818 = vld [vmem:[%s3] sm:$0xf]
        %2820 = vset.pattern.permute.xlu0 32
        %2821 = vperm.xlu0 %2820, %v2818
        %v2822 = vpop.permute.xlu0 %2821
        %v2824 = vsel %vm2161, %v2818, 0
        %2826 = vmatprep.subr.mxu0 %v2803
        %2827 = vmatpush1.msra.mxu0 %v2802
        %2828 = vmatprep.subr.mxu0 %v2807
        %2829 = vmatpush1.msra.mxu0 %v2806
        %2830 = vmatprep.subr.mxu0 %v2811
        %2831 = vmatpush1.msra.mxu0 %v2810
        %2832 = vmatprep.subr.mxu0 %v2815
        %2833 = vmatpush1.msra.mxu0 %v2814
        %2834 = vmatprep.subr.mxu0 0.0
        %2835 = vmatpush1.msra.mxu0 0.0
        %2836 = vmatprep.subr.mxu0 0.0
        %2837 = vmatpush1.msra.mxu0 0.0
        %2838 = vmatprep.subr.mxu0 0.0
        %2839 = vmatpush1.msra.mxu0 0.0
        %2840 = vmatprep.subr.mxu0 0.0
        %2841 = vmatpush1.msra.mxu0 0.0
        %2842 = vmatprep.subr.mxu0 0.0
        %2843 = vmatpush1.msra.mxu0 0.0
        %2844 = vmatprep.subr.mxu0 0.0
        %2845 = vmatpush1.msra.mxu0 0.0
        %2846 = vmatprep.subr.mxu0 0.0
        %2847 = vmatpush1.msra.mxu0 0.0
        %2848 = vmatprep.subr.mxu0 0.0
        %2849 = vmatpush1.msra.mxu0 0.0
        %2850 = vmatprep.subr.mxu0 0.0
        %2851 = vmatpush1.msra.mxu0 0.0
        %2852 = vmatprep.subr.mxu0 0.0
        %2853 = vmatpush1.msra.mxu0 0.0
        %2854 = vmatprep.subr.mxu0 0.0
        %2855 = vmatpush1.msra.mxu0 0.0
        %2856 = vmatprep.subr.mxu0 0.0
        %2857 = vmatpush1.msra.mxu0 0.0
        %2858 = vmatprep.subr.mxu0 0.0
        %2859 = vmatpush1.msra.mxu0 0.0
        %2860 = vmatprep.subr.mxu0 0.0
        %2861 = vmatpush1.msra.mxu0 0.0
        %2862 = vmatprep.subr.mxu0 0.0
        %2863 = vmatpush1.msra.mxu0 0.0
        %2864 = vmatprep.subr.mxu0 0.0
        %2865 = vmatpush1.msra.mxu0 0.0
        %2866 = vmatprep.subr.mxu0 0.0
        %2867 = vmatpush1.msra.mxu0 0.0
        %2868 = vmatprep.subr.mxu0 0.0
        %2869 = vmatpush1.msra.mxu0 0.0
        %2870 = vmatprep.subr.mxu0 0.0
        %2871 = vmatpush1.msra.mxu0 0.0
        %2872 = vmatprep.subr.mxu0 0.0
        %2873 = vmatpush1.msra.mxu0 0.0
        %2874 = vmatprep.subr.mxu0 0.0
        %2875 = vmatpush1.msra.mxu0 0.0
        %2876 = vmatprep.subr.mxu0 0.0
        %2877 = vmatpush1.msra.mxu0 0.0
        %2878 = vmatprep.subr.mxu0 0.0
        %2879 = vmatpush1.msra.mxu0 0.0
        %2880 = vmatprep.subr.mxu0 0.0
        %2881 = vmatpush1.msra.mxu0 0.0
        %2882 = vmatprep.subr.mxu0 0.0
        %2883 = vmatpush1.msra.mxu0 0.0
        %2884 = vmatprep.subr.mxu0 0.0
        %2885 = vmatpush1.msra.mxu0 0.0
        %2886 = vmatprep.subr.mxu0 0.0
        %2887 = vmatpush1.msra.mxu0 0.0
        %2888 = vmatprep.subr.mxu0 0.0
        %2889 = vmatpush1.msra.mxu0 0.0
        %2890 = vmatprep.mubr.f32.mxu0 0.0
        %2891 = vmatmul.mubr.f32.gmra.mrb[0].mxu0 %v2824
        %v2892 = vpop.f32.mrb[0].mxu0
        %v2893 = vadd.f32 %v2822, %v2892
        %v2894 = vpop.f32.mrb[0].mxu0
        %v2895 = vadd.f32 %v2822, %v2894
        %2896 = vdwg.mxu0
        %2897 = vmatprep.subr.mxu0 %v2805
        %2898 = vmatpush1.msra.mxu0 %v2804
        %2899 = vmatprep.subr.mxu0 %v2809
        %2900 = vmatpush1.msra.mxu0 %v2808
        %2901 = vmatprep.subr.mxu0 %v2813
        %2902 = vmatpush1.msra.mxu0 %v2812
        %2903 = vmatprep.subr.mxu0 %v2817
        %2904 = vmatpush1.msra.mxu0 %v2816
        %2905 = vmatprep.subr.mxu0 0.0
        %2906 = vmatpush1.msra.mxu0 0.0
        %2907 = vmatprep.subr.mxu0 0.0
        %2908 = vmatpush1.msra.mxu0 0.0
        %2909 = vmatprep.subr.mxu0 0.0
        %2910 = vmatpush1.msra.mxu0 0.0
        %2911 = vmatprep.subr.mxu0 0.0
        %2912 = vmatpush1.msra.mxu0 0.0
        %2913 = vmatprep.subr.mxu0 0.0
        %2914 = vmatpush1.msra.mxu0 0.0
        %2915 = vmatprep.subr.mxu0 0.0
        %2916 = vmatpush1.msra.mxu0 0.0
        %2917 = vmatprep.subr.mxu0 0.0
        %2918 = vmatpush1.msra.mxu0 0.0
        %2919 = vmatprep.subr.mxu0 0.0
        %2920 = vmatpush1.msra.mxu0 0.0
        %2921 = vmatprep.subr.mxu0 0.0
        %2922 = vmatpush1.msra.mxu0 0.0
        %2923 = vmatprep.subr.mxu0 0.0
        %2924 = vmatpush1.msra.mxu0 0.0
        %2925 = vmatprep.subr.mxu0 0.0
        %2926 = vmatpush1.msra.mxu0 0.0
        %2927 = vmatprep.subr.mxu0 0.0
        %2928 = vmatpush1.msra.mxu0 0.0
        %2929 = vmatprep.subr.mxu0 0.0
        %2930 = vmatpush1.msra.mxu0 0.0
        %2931 = vmatprep.subr.mxu0 0.0
        %2932 = vmatpush1.msra.mxu0 0.0
        %2933 = vmatprep.subr.mxu0 0.0
        %2934 = vmatpush1.msra.mxu0 0.0
        %2935 = vmatprep.subr.mxu0 0.0
        %2936 = vmatpush1.msra.mxu0 0.0
        %2937 = vmatprep.subr.mxu0 0.0
        %2938 = vmatpush1.msra.mxu0 0.0
        %2939 = vmatprep.subr.mxu0 0.0
        %2940 = vmatpush1.msra.mxu0 0.0
        %2941 = vmatprep.subr.mxu0 0.0
        %2942 = vmatpush1.msra.mxu0 0.0
        %2943 = vmatprep.subr.mxu0 0.0
        %2944 = vmatpush1.msra.mxu0 0.0
        %2945 = vmatprep.subr.mxu0 0.0
        %2946 = vmatpush1.msra.mxu0 0.0
        %2947 = vmatprep.subr.mxu0 0.0
        %2948 = vmatpush1.msra.mxu0 0.0
        %2949 = vmatprep.subr.mxu0 0.0
        %2950 = vmatpush1.msra.mxu0 0.0
        %2951 = vmatprep.subr.mxu0 0.0
        %2952 = vmatpush1.msra.mxu0 0.0
        %2953 = vmatprep.subr.mxu0 0.0
        %2954 = vmatpush1.msra.mxu0 0.0
        %2955 = vmatprep.subr.mxu0 0.0
        %2956 = vmatpush1.msra.mxu0 0.0
        %2957 = vmatprep.subr.mxu0 0.0
        %2958 = vmatpush1.msra.mxu0 0.0
        %2959 = vmatprep.subr.mxu0 0.0
        %2960 = vmatpush1.msra.mxu0 0.0
        %2961 = vmatprep.mubr.f32.mxu0 0.0
        %2962 = vmatmul.mubr.f32.gmra.mrb[0].mxu0 %v2824
        %v2963 = vpop.f32.mrb[0].mxu0
        %v2964 = vadd.f32 %v2822, %v2963
        %v2965 = vpop.f32.mrb[0].mxu0
        %v2966 = vadd.f32 %v2822, %v2965
        %2967 = vdwg.mxu0
        %v2972 = vcombine.low %v2893, %v2895
        %v2973 = vcombine.low %v2964, %v2966
        %2976 = vst [vmem:[%s191] sm:$0xff] %v2972
        %2977 = vst [vmem:[%s191 + $0x8] sm:$0xff] %v2973
        %s2978 = sand.u32 %s115, 1
        %s2979 = scalar_lea.sflag [#allocation3], %s2978
        %s2980 = sand.u32 %s115, 1
        %s2981 = smul.addr %s2980, 16
        %s2982 = scalar_lea.vmem [#allocation2], %s2981
        // Predicated region
        $region37: #{mfn_forward_cf.1} parent=35 // pred_check
          %p2983 = pneg %p125
        $region38: #{mfn_forward_cf.1} parent=35 // pred_check_branch
          %2985 = sbr.rel (%p2983) target = $region40
        $region39: #{mfn_forward_cf.1} parent=35 // pred_region
          %s2986 = smul.u32 4, %s18
          %s2988 = ssub.s32 256, 256
          %2989 = vsyncadd %s2979, %s2988
          %s2990 = smul.addr %s2986, 64
          %s2991 = scalar_lea.hbm %s4, %s2990
          %s2993 = sshll.u32 %s2982, 4
          %s2994 = int_to_ptr.vmem [resolvable:$true] %s2993
          %2996 = dma.vmem_to_hbm [thread:$0]  %s2994, 256, %s2991, %s2979
        $region40: #{mfn_forward_cf.1} parent=35 // pred_fallthru
          _
      $region36: #{mfn_forward_cf.1} parent=5 // pred_fallthru
        _
      %p2997 = scmp.le.s32.totalorder 2, %s13
      // Predicated region
      $region41: #{mfn_forward_cf.1} parent=5 // pred_check
        %p2998 = pneg %p2997
      $region42: #{mfn_forward_cf.1} parent=5 // pred_check_branch
        %3000 = sbr.rel (%p2998) target = $region44
      $region43: #{mfn_forward_cf.1} parent=5 // pred_region
        %s3001 = ssub.s32 %s13, 2
        // Predicated region
        $region45: #{mfn_forward_cf.1} parent=43 // pred_check
          %p3002 = pneg %p131
        $region46: #{mfn_forward_cf.1} parent=43 // pred_check_branch
          %3004 = sbr.rel (%p3002) target = $region48
        $region47: #{mfn_forward_cf.1} parent=43 // pred_region
          %s3005 = sand.u32 %s116, 1
          %s3006 = scalar_lea.sflag [#allocation3], %s3005
          %s3007 = sand.u32 %s116, 1
          %s3008 = smul.addr %s3007, 16
          %s3009 = scalar_lea.vmem [#allocation2], %s3008
          %3010 = dma.done %s3006, 256
        $region48: #{mfn_forward_cf.1} parent=43 // pred_fallthru
          _
      $region44: #{mfn_forward_cf.1} parent=5 // pred_fallthru
        _
    $region6: #{mfn_forward_cf.1} parent=1 // loop_footer
      %s17 = sadd.s32 1, %s13
    $region7: #{mfn_forward_cf.1} parent=1 // loop_footer_branch
      %12 = sbr.rel target = $region3
    $region8: #{mfn_forward_cf.1} parent=1 // loop_exit
      _
    %3011 = vsyncpa [#allocation3], 1
    %s3012 = scalar_lea.sflag [#allocation3], 1
    %3013 = vsyncpa %s3012, 1

</llo_original>
